<compile_context>
chip_gen: v5e
topology: v5e:2x2
jax: 0.10.0
libtpu: 0.0.40
codegen_flags: <defaults>
</compile_context>

<pallas_src>
import numpy as np
import jax
import jax.numpy as jnp
from jax import lax
from jax.experimental import pallas as pl
from jax.experimental.pallas import tpu as pltpu


# ----------------------------------------------------------------------------
# Host-side weight re-packing for the space-to-depth (s2d) layout.
# ----------------------------------------------------------------------------
def _s2d_conv3x3_weight(w_oihw):
    """(Co, Ci, 3, 3) conv weight -> (9*4*Ci, 4*Co) matrix on s2d activations.

    Row index:  t*4*Ci + (py*2+px)*Ci + i   (t = coarse shift, (py,px) in phase)
    Col index:  (dy*2+dx)*Co + o            ((dy,dx) out phase)
    """
    w = np.asarray(w_oihw, np.float32)
    co, ci = w.shape[0], w.shape[1]
    W = np.zeros((9, 4 * ci, 4 * co), np.float32)
    for sp in (-1, 0, 1):
        for sq in (-1, 0, 1):
            t = (sp + 1) * 3 + (sq + 1)
            for py in (0, 1):
                for px in (0, 1):
                    for dy in (0, 1):
                        for dx in (0, 1):
                            ky = 2 * sp + py - dy + 1
                            kx = 2 * sq + px - dx + 1
                            if 0 <= ky < 3 and 0 <= kx < 3:
                                W[t,
                                  (py * 2 + px) * ci:(py * 2 + px + 1) * ci,
                                  (dy * 2 + dx) * co:(dy * 2 + dx + 1) * co] = \
                                    w[:, :, ky, kx].T
    return jnp.asarray(W.reshape(9 * 4 * ci, 4 * co))


# ----------------------------------------------------------------------------
# Parameters (deterministic synthetic init + spectral normalization).
# ----------------------------------------------------------------------------
def spectral_norm_weight(w, key, eps=1e-12, n_iter=1):
    out_ch = w.shape[0]
    w_mat = w.reshape(out_ch, -1)
    u = jax.random.normal(key, (out_ch,), jnp.float32)
    u = u / (jnp.linalg.norm(u) + eps)
    v = None
    for _ in range(n_iter):
        v = w_mat.T @ u
        v = v / (jnp.linalg.norm(v) + eps)
        u = w_mat @ v
        u = u / (jnp.linalg.norm(u) + eps)
    sigma = u @ (w_mat @ v)
    return w / sigma


def init_params(key, in_ch, out_ch):
    hid = out_ch // 4
    k = jax.random.split(key, 16)
    w = lambda kk, oc, ic, kh, kw: 0.1 * jax.random.normal(kk, (oc, ic, kh, kw), jnp.float32)
    b = lambda kk, oc: 0.05 * jax.random.normal(kk, (oc,), jnp.float32)
    return {
        "w1": spectral_norm_weight(w(k[0], hid, in_ch, 1, 1), k[1]),
        "b1": b(k[2], hid),
        "w2": spectral_norm_weight(w(k[3], hid, hid, 3, 3), k[4]),
        "b2": b(k[5], hid),
        "w3": spectral_norm_weight(w(k[6], hid, hid, 3, 3), k[7]),
        "b3": b(k[8], hid),
        "w4": spectral_norm_weight(w(k[9], out_ch, hid, 1, 1), k[10]),
        "b4": b(k[11], out_ch),
        "ws": spectral_norm_weight(w(k[12], out_ch - in_ch, in_ch, 1, 1), k[13]),
        "bs": b(k[14], out_ch - in_ch),
    }


# ----------------------------------------------------------------------------
# Wrapper: NCHW in -> NCHW out; kernel works on (Bt*Hd*Wd, 4*C) s2d tiles with
# rows ordered (image, q, p) and a lane-dense (Bt*Hd, Wd*Cout) output slab.
# ----------------------------------------------------------------------------
def block_down(x_nchw, params, block_batch=8):
    N, Cin, H, W = x_nchw.shape
    assert H % 16 == 0 and W % 4 == 0, "tiling assumes H % 16 == 0 and W % 4 == 0"
    Cout = params["w4"].shape[0]
    hid = params["w1"].shape[0]
    assert Cout == 4 * hid, "channel_ratio=4 layout assumed (Cout == 4*hid)"
    Hd, Wd = H // 2, W // 2
    HWd = Hd * Wd
    FH = 4 * hid            # == Cout (lanes of the hidden activations)
    FC = 4 * Cin            # lanes of the s2d input

    f32, bf16 = jnp.float32, jnp.bfloat16

    # ---- grid sizing: >= 2 steps when N >= 2 (pipelining + v7x dual-TC);
    #      per-step working set kept well below the v7x 64 MiB VMEM.
    Bt = max(1, min(block_batch, (N + 1) // 2))

    def vmem_bytes(bt):
        mt = bt * HWd
        return (2 * mt * FC * 2            # double-buffered bf16 input tile
                + 2 * bt * Hd * Wd * Cout * 4   # double-buffered f32 output tile
                + mt * 128 * 4             # mask tile (lane-padded)
                + 8 * mt * 128 * 4)        # f32 intermediates / spill slack

    while Bt > 1 and vmem_bytes(Bt) > 24 * (1 << 20):
        Bt -= 1
    while Bt > 1 and N % Bt != 0:          # avoid wasted padded-batch work
        Bt -= 1
    Npad = -(-N // Bt) * Bt
    MT = Bt * HWd                          # matmul M per grid step

    # ---- input: NCHW -> s2d, rows ordered (n, q, p), lanes (dy, dx, c), bf16.
    xs = jnp.transpose(x_nchw, (0, 2, 3, 1)).reshape(N, Hd, 2, Wd, 2, Cin)
    xs = jnp.transpose(xs, (0, 3, 1, 2, 4, 5)).reshape(N * HWd, FC).astype(bf16)
    if Npad != N:
        xs = jnp.pad(xs, ((0, (Npad - N) * HWd), (0, 0)))

    # ---- precomputed boundary masks for the 9 coarse shifts (row = q*Hd + p).
    pp = np.arange(HWd, dtype=np.int64) % Hd
    qq = np.arange(HWd, dtype=np.int64) // Hd
    m_np = np.zeros((HWd, 9), np.float32)
    for t in range(9):
        sp, sq = t // 3 - 1, t % 3 - 1
        m_np[:, t] = ((pp + sp >= 0) & (pp + sp < Hd) &
                      (qq + sq >= 0) & (qq + sq < Wd))
    mask = jnp.asarray(np.tile(m_np, (Bt, 1)))                    # (MT, 9) f32

    # ---- conv1 (1x1): block-diagonal over the 4 phases.
    w1m = params["w1"][:, :, 0, 0].T                              # (Cin, hid)
    w1_bd = jnp.kron(jnp.eye(4, dtype=f32), w1m).astype(bf16)     # (FC, FH)

    # ---- conv2 / conv3 (3x3, pad=1) fused tap weights in s2d space.
    w2_s2d = _s2d_conv3x3_weight(params["w2"]).astype(bf16)       # (9*FH, FH)
    w3_s2d = _s2d_conv3x3_weight(params["w3"]).astype(bf16)

    # ---- avgpool(2) folded into conv4 and the shortcut; both fused into one
    #      (FH+FC, Cout) matrix so the epilogue is a single matmul.
    w4m = params["w4"][:, :, 0, 0].T                              # (hid, Cout)
    w4p = jnp.concatenate([0.25 * w4m] * 4, axis=0)               # (FH, Cout)
    wsm = params["ws"][:, :, 0, 0].T                              # (Cin, Cout-Cin)
    ws_full = jnp.concatenate([jnp.eye(Cin, dtype=f32), wsm], axis=1)
    wsp = jnp.concatenate([0.25 * ws_full] * 4, axis=0)           # (FC, Cout)
    wfin = jnp.concatenate([w4p, wsp], axis=0).astype(bf16)       # (FH+FC, Cout)

    # ---- packed biases (all length Cout == FH), one small DMA.
    bc = params["b4"] + jnp.concatenate([jnp.zeros((Cin,), f32), params["bs"]])
    biases = jnp.stack([jnp.tile(params["b1"], 4),
                        jnp.tile(params["b2"], 4),
                        jnp.tile(params["b3"], 4),
                        bc]).astype(f32)                          # (4, Cout)

    def kernel(x_ref, m_ref, w1_ref, w2_ref, w3_ref, wf_ref, b_ref, o_ref):
        x_bf = x_ref[...]                          # (MT, FC) bf16
        x32 = x_bf.astype(f32)                     # elementwise math in f32 (v5e-safe)
        masks = m_ref[...]                         # (MT, 9) f32

        def conv3x3(g, w_ref, b_row):
            # g: (MT, FH) f32.  Accumulate 9 small dots (pieces never co-live;
            # no 144-lane concat, no vreg spills).
            acc = jnp.dot(g.astype(bf16), w_ref[4 * FH:5 * FH, :],
                          preferred_element_type=f32)
            for t in range(9):
                if t == 4:
                    continue                       # center tap handled above
                sp, sq = t // 3 - 1, t % 3 - 1
                off = sq * Hd + sp                 # row = q*Hd + p
                piece = pltpu.roll(g, shift=(-off) % MT, axis=0) * masks[:, t:t + 1]
                acc = acc + jnp.dot(piece.astype(bf16),
                                    w_ref[t * FH:(t + 1) * FH, :],
                                    preferred_element_type=f32)
            return acc + b_row

        # conv1 (1x1) on relu(x)
        h = jnp.dot(jnp.maximum(x32, 0.0).astype(bf16), w1_ref[...],
                    preferred_element_type=f32) + b_ref[0:1, :]
        # conv2, conv3 (3x3, padding=1)
        h = conv3x3(jnp.maximum(h, 0.0), w2_ref, b_ref[1:2, :])
        h = conv3x3(jnp.maximum(h, 0.0), w3_ref, b_ref[2:3, :])
        # relu -> avgpool(2) -> conv4, fused with the pooled (identity|conv)
        # shortcut into a single matmul + combined bias.
        hx = jnp.concatenate([jnp.maximum(h, 0.0).astype(bf16), x_bf], axis=1)
        out = jnp.dot(hx, wf_ref[...], preferred_element_type=f32) + b_ref[3:4, :]

        # Lane-dense store: rows (b, q, p) -> o[b*Hd + p, q*Cout + c].
        # Static 8-sublane slices of `out` placed at static lane offsets, so the
        # output VMEM tile (and its HBM DMA) is fully lane-dense.
        for b in range(Bt):
            for q in range(Wd):
                o_ref[b * Hd:(b + 1) * Hd, q * Cout:(q + 1) * Cout] = \
                    out[b * HWd + q * Hd: b * HWd + (q + 1) * Hd, :]

    def full_spec(a):
        return pl.BlockSpec(a.shape, lambda n: (0, 0))

    out2d = pl.pallas_call(
        kernel,
        out_shape=jax.ShapeDtypeStruct((Npad * Hd, Wd * Cout), f32),
        grid_spec=pltpu.PrefetchScalarGridSpec(
            num_scalar_prefetch=0,
            grid=(Npad // Bt,),
            in_specs=[
                pl.BlockSpec((MT, FC), lambda n: (n, 0)),
                full_spec(mask), full_spec(w1_bd), full_spec(w2_s2d),
                full_spec(w3_s2d), full_spec(wfin), full_spec(biases),
            ],
            out_specs=pl.BlockSpec((Bt * Hd, Wd * Cout), lambda n: (n, 0)),
        ),
        compiler_params=pltpu.CompilerParams(
            dimension_semantics=("parallel",)),
    )(xs, mask, w1_bd, w2_s2d, w3_s2d, wfin, biases)

    out = out2d[: N * Hd].reshape(N, Hd, Wd, Cout)
    return jnp.transpose(out, (0, 3, 1, 2))


# ----------------------------------------------------------------------------
# Pure-JAX reference (same spectrally-normalized weights) for a sanity check.
# ----------------------------------------------------------------------------
def ref_block_down(x, params):
    relu = jax.nn.relu

    def conv(x, w, b, pad):
        y = jax.lax.conv_general_dilated(
            x, w, window_strides=(1, 1),
            padding=[(pad, pad), (pad, pad)],
            dimension_numbers=("NCHW", "OIHW", "NCHW"))
        return y + b[None, :, None, None]

    def avgpool2(x):
        N, C, H, W = x.shape
        return x.reshape(N, C, H // 2, 2, W // 2, 2).mean(axis=(3, 5))

    h = conv(relu(x), params["w1"], params["b1"], 0)
    h = conv(relu(h), params["w2"], params["b2"], 1)
    h = conv(relu(h), params["w3"], params["b3"], 1)
    h = relu(h)
    h = avgpool2(h)
    h = conv(h, params["w4"], params["b4"], 0)
    xs = avgpool2(x)
    sc = jnp.concatenate([xs, conv(xs, params["ws"], params["bs"], 0)], axis=1)
    return h + sc


if __name__ == "__main__":
    key = jax.random.PRNGKey(0)
    kx, kp = jax.random.split(key)
    N, Cin, Cout, H, W = 2, 8, 16, 16, 16

    x = jax.random.normal(kx, (N, Cin, H, W), jnp.float32)
    params = init_params(kp, Cin, Cout)

    y = block_down(x, params)
    y = jax.block_until_ready(y)

    assert y.shape == (N, Cout, H // 2, W // 2), y.shape
    y_ref = ref_block_down(x, params)
    err = float(jnp.max(jnp.abs(y - y_ref)))
    scale = float(jnp.max(jnp.abs(y_ref)))
    tol = 5e-2 * max(1.0, scale)   # bf16 matmul operands / bf16 input, f32 accumulation
    if err > tol:
        raise AssertionError(f"kernel/reference mismatch: max abs err = {err}, tol = {tol}")

    print("KERNEL_OK")
</pallas_src>

<mosaic_0001>
module attributes {stable_mosaic.version = 11 : i64} {
  func.func @kernel(%arg0: i32, %arg1: memref<64x32xbf16, #tpu.memory_space<vmem>>, %arg2: memref<64x9xf32, #tpu.memory_space<vmem>>, %arg3: memref<32x16xbf16, #tpu.memory_space<vmem>>, %arg4: memref<144x16xbf16, #tpu.memory_space<vmem>>, %arg5: memref<144x16xbf16, #tpu.memory_space<vmem>>, %arg6: memref<48x16xbf16, #tpu.memory_space<vmem>>, %arg7: memref<4x16xf32, #tpu.memory_space<vmem>>, %arg8: memref<8x128xf32, #tpu.memory_space<vmem>>) attributes {dimension_semantics = [#tpu.dimension_semantics<parallel>], iteration_bounds = array<i64: 2>, scalar_prefetch = 0 : i64, scratch_operands = 0 : i64, tpu.core_type = #tpu.core_type<tc>, window_params = [{transform_indices = @transform_0, window_bounds = array<i64: 64, 32>}, {pipeline_mode = #tpu.pipeline_mode<synchronous>, transform_indices = @transform_1, window_bounds = array<i64: 64, 9>}, {pipeline_mode = #tpu.pipeline_mode<synchronous>, transform_indices = @transform_2, window_bounds = array<i64: 32, 16>}, {pipeline_mode = #tpu.pipeline_mode<synchronous>, transform_indices = @transform_3, window_bounds = array<i64: 144, 16>}, {pipeline_mode = #tpu.pipeline_mode<synchronous>, transform_indices = @transform_4, window_bounds = array<i64: 144, 16>}, {pipeline_mode = #tpu.pipeline_mode<synchronous>, transform_indices = @transform_5, window_bounds = array<i64: 48, 16>}, {pipeline_mode = #tpu.pipeline_mode<synchronous>, transform_indices = @transform_6, window_bounds = array<i64: 4, 16>}, {transform_indices = @transform_7, window_bounds = array<i64: 8, 128>}]} {
    %c0 = arith.constant 0 : index
    %c0_0 = arith.constant 0 : index
    %0 = vector.load %arg1[%c0, %c0_0] : memref<64x32xbf16, #tpu.memory_space<vmem>>, vector<64x32xbf16>
    %1 = arith.extf %0 : vector<64x32xbf16> to vector<64x32xf32>
    %c0_1 = arith.constant 0 : index
    %c0_2 = arith.constant 0 : index
    %2 = vector.load %arg2[%c0_1, %c0_2] : memref<64x9xf32, #tpu.memory_space<vmem>>, vector<64x9xf32>
    %cst = arith.constant 0.000000e+00 : f32
    %3 = vector.broadcast %cst : f32 to vector<64x32xf32>
    %4 = arith.maximumf %1, %3 : vector<64x32xf32>
    %5 = arith.truncf %4 : vector<64x32xf32> to vector<64x32xbf16>
    %c0_3 = arith.constant 0 : index
    %c0_4 = arith.constant 0 : index
    %6 = vector.load %arg3[%c0_3, %c0_4] : memref<32x16xbf16, #tpu.memory_space<vmem>>, vector<32x16xbf16>
    %cst_5 = arith.constant dense<0.000000e+00> : vector<64x16xf32>
    %7 = tpu.matmul %5, %6, %cst_5 {dimension_numbers = #tpu.dot_dimension_numbers<[1], [0], [0], [1], [0, 0, 1, 1], [], []>} : vector<64x32xbf16>, vector<32x16xbf16>, vector<64x16xf32> -> vector<64x16xf32>
    %c0_6 = arith.constant 0 : index
    %c0_7 = arith.constant 0 : index
    %8 = vector.load %arg7[%c0_6, %c0_7] : memref<4x16xf32, #tpu.memory_space<vmem>>, vector<1x16xf32>
    %9 = vector.broadcast %8 : vector<1x16xf32> to vector<64x16xf32>
    %10 = arith.addf %7, %9 : vector<64x16xf32>
    %cst_8 = arith.constant 0.000000e+00 : f32
    %11 = vector.broadcast %cst_8 : f32 to vector<64x16xf32>
    %12 = arith.maximumf %10, %11 : vector<64x16xf32>
    %c1 = arith.constant 1 : index
    %c0_9 = arith.constant 0 : index
    %13 = vector.load %arg7[%c1, %c0_9] : memref<4x16xf32, #tpu.memory_space<vmem>>, vector<1x16xf32>
    %14 = arith.truncf %12 : vector<64x16xf32> to vector<64x16xbf16>
    %c64 = arith.constant 64 : index
    %c0_10 = arith.constant 0 : index
    %15 = vector.load %arg4[%c64, %c0_10] : memref<144x16xbf16, #tpu.memory_space<vmem>>, vector<16x16xbf16>
    %cst_11 = arith.constant dense<0.000000e+00> : vector<64x16xf32>
    %16 = tpu.matmul %14, %15, %cst_11 {dimension_numbers = #tpu.dot_dimension_numbers<[1], [0], [0], [1], [0, 0, 1, 1], [], []>} : vector<64x16xbf16>, vector<16x16xbf16>, vector<64x16xf32> -> vector<64x16xf32>
    %c9_i32 = arith.constant 9 : i32
    %17 = tpu.dynamic_rotate %12 by %c9_i32 dim 0 : vector<64x16xf32>, i32 -> vector<64x16xf32>
    %18 = vector.extract_strided_slice %2 {offsets = [0, 0], sizes = [64, 1], strides = [1, 1]} : vector<64x9xf32> to vector<64x1xf32>
    %19 = vector.broadcast %18 : vector<64x1xf32> to vector<64x16xf32>
    %20 = arith.mulf %17, %19 : vector<64x16xf32>
    %21 = arith.truncf %20 : vector<64x16xf32> to vector<64x16xbf16>
    %c0_12 = arith.constant 0 : index
    %c0_13 = arith.constant 0 : index
    %22 = vector.load %arg4[%c0_12, %c0_13] : memref<144x16xbf16, #tpu.memory_space<vmem>>, vector<16x16xbf16>
    %cst_14 = arith.constant dense<0.000000e+00> : vector<64x16xf32>
    %23 = tpu.matmul %21, %22, %cst_14 {dimension_numbers = #tpu.dot_dimension_numbers<[1], [0], [0], [1], [0, 0, 1, 1], [], []>} : vector<64x16xbf16>, vector<16x16xbf16>, vector<64x16xf32> -> vector<64x16xf32>
    %24 = arith.addf %16, %23 : vector<64x16xf32>
    %c1_i32 = arith.constant 1 : i32
    %25 = tpu.dynamic_rotate %12 by %c1_i32 dim 0 : vector<64x16xf32>, i32 -> vector<64x16xf32>
    %26 = vector.extract_strided_slice %2 {offsets = [0, 1], sizes = [64, 1], strides = [1, 1]} : vector<64x9xf32> to vector<64x1xf32>
    %27 = vector.broadcast %26 : vector<64x1xf32> to vector<64x16xf32>
    %28 = arith.mulf %25, %27 : vector<64x16xf32>
    %29 = arith.truncf %28 : vector<64x16xf32> to vector<64x16xbf16>
    %c16 = arith.constant 16 : index
    %c0_15 = arith.constant 0 : index
    %30 = vector.load %arg4[%c16, %c0_15] : memref<144x16xbf16, #tpu.memory_space<vmem>>, vector<16x16xbf16>
    %cst_16 = arith.constant dense<0.000000e+00> : vector<64x16xf32>
    %31 = tpu.matmul %29, %30, %cst_16 {dimension_numbers = #tpu.dot_dimension_numbers<[1], [0], [0], [1], [0, 0, 1, 1], [], []>} : vector<64x16xbf16>, vector<16x16xbf16>, vector<64x16xf32> -> vector<64x16xf32>
    %32 = arith.addf %24, %31 : vector<64x16xf32>
    %c57_i32 = arith.constant 57 : i32
    %33 = tpu.dynamic_rotate %12 by %c57_i32 dim 0 : vector<64x16xf32>, i32 -> vector<64x16xf32>
    %34 = vector.extract_strided_slice %2 {offsets = [0, 2], sizes = [64, 1], strides = [1, 1]} : vector<64x9xf32> to vector<64x1xf32>
    %35 = vector.broadcast %34 : vector<64x1xf32> to vector<64x16xf32>
    %36 = arith.mulf %33, %35 : vector<64x16xf32>
    %37 = arith.truncf %36 : vector<64x16xf32> to vector<64x16xbf16>
    %c32 = arith.constant 32 : index
    %c0_17 = arith.constant 0 : index
    %38 = vector.load %arg4[%c32, %c0_17] : memref<144x16xbf16, #tpu.memory_space<vmem>>, vector<16x16xbf16>
    %cst_18 = arith.constant dense<0.000000e+00> : vector<64x16xf32>
    %39 = tpu.matmul %37, %38, %cst_18 {dimension_numbers = #tpu.dot_dimension_numbers<[1], [0], [0], [1], [0, 0, 1, 1], [], []>} : vector<64x16xbf16>, vector<16x16xbf16>, vector<64x16xf32> -> vector<64x16xf32>
    %40 = arith.addf %32, %39 : vector<64x16xf32>
    %c8_i32 = arith.constant 8 : i32
    %41 = tpu.dynamic_rotate %12 by %c8_i32 dim 0 : vector<64x16xf32>, i32 -> vector<64x16xf32>
    %42 = vector.extract_strided_slice %2 {offsets = [0, 3], sizes = [64, 1], strides = [1, 1]} : vector<64x9xf32> to vector<64x1xf32>
    %43 = vector.broadcast %42 : vector<64x1xf32> to vector<64x16xf32>
    %44 = arith.mulf %41, %43 : vector<64x16xf32>
    %45 = arith.truncf %44 : vector<64x16xf32> to vector<64x16xbf16>
    %c48 = arith.constant 48 : index
    %c0_19 = arith.constant 0 : index
    %46 = vector.load %arg4[%c48, %c0_19] : memref<144x16xbf16, #tpu.memory_space<vmem>>, vector<16x16xbf16>
    %cst_20 = arith.constant dense<0.000000e+00> : vector<64x16xf32>
    %47 = tpu.matmul %45, %46, %cst_20 {dimension_numbers = #tpu.dot_dimension_numbers<[1], [0], [0], [1], [0, 0, 1, 1], [], []>} : vector<64x16xbf16>, vector<16x16xbf16>, vector<64x16xf32> -> vector<64x16xf32>
    %48 = arith.addf %40, %47 : vector<64x16xf32>
    %c56_i32 = arith.constant 56 : i32
    %49 = tpu.dynamic_rotate %12 by %c56_i32 dim 0 : vector<64x16xf32>, i32 -> vector<64x16xf32>
    %50 = vector.extract_strided_slice %2 {offsets = [0, 5], sizes = [64, 1], strides = [1, 1]} : vector<64x9xf32> to vector<64x1xf32>
    %51 = vector.broadcast %50 : vector<64x1xf32> to vector<64x16xf32>
    %52 = arith.mulf %49, %51 : vector<64x16xf32>
    %53 = arith.truncf %52 : vector<64x16xf32> to vector<64x16xbf16>
    %c80 = arith.constant 80 : index
    %c0_21 = arith.constant 0 : index
    %54 = vector.load %arg4[%c80, %c0_21] : memref<144x16xbf16, #tpu.memory_space<vmem>>, vector<16x16xbf16>
    %cst_22 = arith.constant dense<0.000000e+00> : vector<64x16xf32>
    %55 = tpu.matmul %53, %54, %cst_22 {dimension_numbers = #tpu.dot_dimension_numbers<[1], [0], [0], [1], [0, 0, 1, 1], [], []>} : vector<64x16xbf16>, vector<16x16xbf16>, vector<64x16xf32> -> vector<64x16xf32>
    %56 = arith.addf %48, %55 : vector<64x16xf32>
    %c7_i32 = arith.constant 7 : i32
    %57 = tpu.dynamic_rotate %12 by %c7_i32 dim 0 : vector<64x16xf32>, i32 -> vector<64x16xf32>
    %58 = vector.extract_strided_slice %2 {offsets = [0, 6], sizes = [64, 1], strides = [1, 1]} : vector<64x9xf32> to vector<64x1xf32>
    %59 = vector.broadcast %58 : vector<64x1xf32> to vector<64x16xf32>
    %60 = arith.mulf %57, %59 : vector<64x16xf32>
    %61 = arith.truncf %60 : vector<64x16xf32> to vector<64x16xbf16>
    %c96 = arith.constant 96 : index
    %c0_23 = arith.constant 0 : index
    %62 = vector.load %arg4[%c96, %c0_23] : memref<144x16xbf16, #tpu.memory_space<vmem>>, vector<16x16xbf16>
    %cst_24 = arith.constant dense<0.000000e+00> : vector<64x16xf32>
    %63 = tpu.matmul %61, %62, %cst_24 {dimension_numbers = #tpu.dot_dimension_numbers<[1], [0], [0], [1], [0, 0, 1, 1], [], []>} : vector<64x16xbf16>, vector<16x16xbf16>, vector<64x16xf32> -> vector<64x16xf32>
    %64 = arith.addf %56, %63 : vector<64x16xf32>
    %c63_i32 = arith.constant 63 : i32
    %65 = tpu.dynamic_rotate %12 by %c63_i32 dim 0 : vector<64x16xf32>, i32 -> vector<64x16xf32>
    %66 = vector.extract_strided_slice %2 {offsets = [0, 7], sizes = [64, 1], strides = [1, 1]} : vector<64x9xf32> to vector<64x1xf32>
    %67 = vector.broadcast %66 : vector<64x1xf32> to vector<64x16xf32>
    %68 = arith.mulf %65, %67 : vector<64x16xf32>
    %69 = arith.truncf %68 : vector<64x16xf32> to vector<64x16xbf16>
    %c112 = arith.constant 112 : index
    %c0_25 = arith.constant 0 : index
    %70 = vector.load %arg4[%c112, %c0_25] : memref<144x16xbf16, #tpu.memory_space<vmem>>, vector<16x16xbf16>
    %cst_26 = arith.constant dense<0.000000e+00> : vector<64x16xf32>
    %71 = tpu.matmul %69, %70, %cst_26 {dimension_numbers = #tpu.dot_dimension_numbers<[1], [0], [0], [1], [0, 0, 1, 1], [], []>} : vector<64x16xbf16>, vector<16x16xbf16>, vector<64x16xf32> -> vector<64x16xf32>
    %72 = arith.addf %64, %71 : vector<64x16xf32>
    %c55_i32 = arith.constant 55 : i32
    %73 = tpu.dynamic_rotate %12 by %c55_i32 dim 0 : vector<64x16xf32>, i32 -> vector<64x16xf32>
    %74 = vector.extract_strided_slice %2 {offsets = [0, 8], sizes = [64, 1], strides = [1, 1]} : vector<64x9xf32> to vector<64x1xf32>
    %75 = vector.broadcast %74 : vector<64x1xf32> to vector<64x16xf32>
    %76 = arith.mulf %73, %75 : vector<64x16xf32>
    %77 = arith.truncf %76 : vector<64x16xf32> to vector<64x16xbf16>
    %c128 = arith.constant 128 : index
    %c0_27 = arith.constant 0 : index
    %78 = vector.load %arg4[%c128, %c0_27] : memref<144x16xbf16, #tpu.memory_space<vmem>>, vector<16x16xbf16>
    %cst_28 = arith.constant dense<0.000000e+00> : vector<64x16xf32>
    %79 = tpu.matmul %77, %78, %cst_28 {dimension_numbers = #tpu.dot_dimension_numbers<[1], [0], [0], [1], [0, 0, 1, 1], [], []>} : vector<64x16xbf16>, vector<16x16xbf16>, vector<64x16xf32> -> vector<64x16xf32>
    %80 = arith.addf %72, %79 : vector<64x16xf32>
    %81 = vector.broadcast %13 : vector<1x16xf32> to vector<64x16xf32>
    %82 = arith.addf %80, %81 : vector<64x16xf32>
    %cst_29 = arith.constant 0.000000e+00 : f32
    %83 = vector.broadcast %cst_29 : f32 to vector<64x16xf32>
    %84 = arith.maximumf %82, %83 : vector<64x16xf32>
    %c2 = arith.constant 2 : index
    %c0_30 = arith.constant 0 : index
    %85 = vector.load %arg7[%c2, %c0_30] : memref<4x16xf32, #tpu.memory_space<vmem>>, vector<1x16xf32>
    %86 = arith.truncf %84 : vector<64x16xf32> to vector<64x16xbf16>
    %c64_31 = arith.constant 64 : index
    %c0_32 = arith.constant 0 : index
    %87 = vector.load %arg5[%c64_31, %c0_32] : memref<144x16xbf16, #tpu.memory_space<vmem>>, vector<16x16xbf16>
    %cst_33 = arith.constant dense<0.000000e+00> : vector<64x16xf32>
    %88 = tpu.matmul %86, %87, %cst_33 {dimension_numbers = #tpu.dot_dimension_numbers<[1], [0], [0], [1], [0, 0, 1, 1], [], []>} : vector<64x16xbf16>, vector<16x16xbf16>, vector<64x16xf32> -> vector<64x16xf32>
    %c9_i32_34 = arith.constant 9 : i32
    %89 = tpu.dynamic_rotate %84 by %c9_i32_34 dim 0 : vector<64x16xf32>, i32 -> vector<64x16xf32>
    %90 = vector.extract_strided_slice %2 {offsets = [0, 0], sizes = [64, 1], strides = [1, 1]} : vector<64x9xf32> to vector<64x1xf32>
    %91 = vector.broadcast %90 : vector<64x1xf32> to vector<64x16xf32>
    %92 = arith.mulf %89, %91 : vector<64x16xf32>
    %93 = arith.truncf %92 : vector<64x16xf32> to vector<64x16xbf16>
    %c0_35 = arith.constant 0 : index
    %c0_36 = arith.constant 0 : index
    %94 = vector.load %arg5[%c0_35, %c0_36] : memref<144x16xbf16, #tpu.memory_space<vmem>>, vector<16x16xbf16>
    %cst_37 = arith.constant dense<0.000000e+00> : vector<64x16xf32>
    %95 = tpu.matmul %93, %94, %cst_37 {dimension_numbers = #tpu.dot_dimension_numbers<[1], [0], [0], [1], [0, 0, 1, 1], [], []>} : vector<64x16xbf16>, vector<16x16xbf16>, vector<64x16xf32> -> vector<64x16xf32>
    %96 = arith.addf %88, %95 : vector<64x16xf32>
    %c1_i32_38 = arith.constant 1 : i32
    %97 = tpu.dynamic_rotate %84 by %c1_i32_38 dim 0 : vector<64x16xf32>, i32 -> vector<64x16xf32>
    %98 = vector.extract_strided_slice %2 {offsets = [0, 1], sizes = [64, 1], strides = [1, 1]} : vector<64x9xf32> to vector<64x1xf32>
    %99 = vector.broadcast %98 : vector<64x1xf32> to vector<64x16xf32>
    %100 = arith.mulf %97, %99 : vector<64x16xf32>
    %101 = arith.truncf %100 : vector<64x16xf32> to vector<64x16xbf16>
    %c16_39 = arith.constant 16 : index
    %c0_40 = arith.constant 0 : index
    %102 = vector.load %arg5[%c16_39, %c0_40] : memref<144x16xbf16, #tpu.memory_space<vmem>>, vector<16x16xbf16>
    %cst_41 = arith.constant dense<0.000000e+00> : vector<64x16xf32>
    %103 = tpu.matmul %101, %102, %cst_41 {dimension_numbers = #tpu.dot_dimension_numbers<[1], [0], [0], [1], [0, 0, 1, 1], [], []>} : vector<64x16xbf16>, vector<16x16xbf16>, vector<64x16xf32> -> vector<64x16xf32>
    %104 = arith.addf %96, %103 : vector<64x16xf32>
    %c57_i32_42 = arith.constant 57 : i32
    %105 = tpu.dynamic_rotate %84 by %c57_i32_42 dim 0 : vector<64x16xf32>, i32 -> vector<64x16xf32>
    %106 = vector.extract_strided_slice %2 {offsets = [0, 2], sizes = [64, 1], strides = [1, 1]} : vector<64x9xf32> to vector<64x1xf32>
    %107 = vector.broadcast %106 : vector<64x1xf32> to vector<64x16xf32>
    %108 = arith.mulf %105, %107 : vector<64x16xf32>
    %109 = arith.truncf %108 : vector<64x16xf32> to vector<64x16xbf16>
    %c32_43 = arith.constant 32 : index
    %c0_44 = arith.constant 0 : index
    %110 = vector.load %arg5[%c32_43, %c0_44] : memref<144x16xbf16, #tpu.memory_space<vmem>>, vector<16x16xbf16>
    %cst_45 = arith.constant dense<0.000000e+00> : vector<64x16xf32>
    %111 = tpu.matmul %109, %110, %cst_45 {dimension_numbers = #tpu.dot_dimension_numbers<[1], [0], [0], [1], [0, 0, 1, 1], [], []>} : vector<64x16xbf16>, vector<16x16xbf16>, vector<64x16xf32> -> vector<64x16xf32>
    %112 = arith.addf %104, %111 : vector<64x16xf32>
    %c8_i32_46 = arith.constant 8 : i32
    %113 = tpu.dynamic_rotate %84 by %c8_i32_46 dim 0 : vector<64x16xf32>, i32 -> vector<64x16xf32>
    %114 = vector.extract_strided_slice %2 {offsets = [0, 3], sizes = [64, 1], strides = [1, 1]} : vector<64x9xf32> to vector<64x1xf32>
    %115 = vector.broadcast %114 : vector<64x1xf32> to vector<64x16xf32>
    %116 = arith.mulf %113, %115 : vector<64x16xf32>
    %117 = arith.truncf %116 : vector<64x16xf32> to vector<64x16xbf16>
    %c48_47 = arith.constant 48 : index
    %c0_48 = arith.constant 0 : index
    %118 = vector.load %arg5[%c48_47, %c0_48] : memref<144x16xbf16, #tpu.memory_space<vmem>>, vector<16x16xbf16>
    %cst_49 = arith.constant dense<0.000000e+00> : vector<64x16xf32>
    %119 = tpu.matmul %117, %118, %cst_49 {dimension_numbers = #tpu.dot_dimension_numbers<[1], [0], [0], [1], [0, 0, 1, 1], [], []>} : vector<64x16xbf16>, vector<16x16xbf16>, vector<64x16xf32> -> vector<64x16xf32>
    %120 = arith.addf %112, %119 : vector<64x16xf32>
    %c56_i32_50 = arith.constant 56 : i32
    %121 = tpu.dynamic_rotate %84 by %c56_i32_50 dim 0 : vector<64x16xf32>, i32 -> vector<64x16xf32>
    %122 = vector.extract_strided_slice %2 {offsets = [0, 5], sizes = [64, 1], strides = [1, 1]} : vector<64x9xf32> to vector<64x1xf32>
    %123 = vector.broadcast %122 : vector<64x1xf32> to vector<64x16xf32>
    %124 = arith.mulf %121, %123 : vector<64x16xf32>
    %125 = arith.truncf %124 : vector<64x16xf32> to vector<64x16xbf16>
    %c80_51 = arith.constant 80 : index
    %c0_52 = arith.constant 0 : index
    %126 = vector.load %arg5[%c80_51, %c0_52] : memref<144x16xbf16, #tpu.memory_space<vmem>>, vector<16x16xbf16>
    %cst_53 = arith.constant dense<0.000000e+00> : vector<64x16xf32>
    %127 = tpu.matmul %125, %126, %cst_53 {dimension_numbers = #tpu.dot_dimension_numbers<[1], [0], [0], [1], [0, 0, 1, 1], [], []>} : vector<64x16xbf16>, vector<16x16xbf16>, vector<64x16xf32> -> vector<64x16xf32>
    %128 = arith.addf %120, %127 : vector<64x16xf32>
    %c7_i32_54 = arith.constant 7 : i32
    %129 = tpu.dynamic_rotate %84 by %c7_i32_54 dim 0 : vector<64x16xf32>, i32 -> vector<64x16xf32>
    %130 = vector.extract_strided_slice %2 {offsets = [0, 6], sizes = [64, 1], strides = [1, 1]} : vector<64x9xf32> to vector<64x1xf32>
    %131 = vector.broadcast %130 : vector<64x1xf32> to vector<64x16xf32>
    %132 = arith.mulf %129, %131 : vector<64x16xf32>
    %133 = arith.truncf %132 : vector<64x16xf32> to vector<64x16xbf16>
    %c96_55 = arith.constant 96 : index
    %c0_56 = arith.constant 0 : index
    %134 = vector.load %arg5[%c96_55, %c0_56] : memref<144x16xbf16, #tpu.memory_space<vmem>>, vector<16x16xbf16>
    %cst_57 = arith.constant dense<0.000000e+00> : vector<64x16xf32>
    %135 = tpu.matmul %133, %134, %cst_57 {dimension_numbers = #tpu.dot_dimension_numbers<[1], [0], [0], [1], [0, 0, 1, 1], [], []>} : vector<64x16xbf16>, vector<16x16xbf16>, vector<64x16xf32> -> vector<64x16xf32>
    %136 = arith.addf %128, %135 : vector<64x16xf32>
    %c63_i32_58 = arith.constant 63 : i32
    %137 = tpu.dynamic_rotate %84 by %c63_i32_58 dim 0 : vector<64x16xf32>, i32 -> vector<64x16xf32>
    %138 = vector.extract_strided_slice %2 {offsets = [0, 7], sizes = [64, 1], strides = [1, 1]} : vector<64x9xf32> to vector<64x1xf32>
    %139 = vector.broadcast %138 : vector<64x1xf32> to vector<64x16xf32>
    %140 = arith.mulf %137, %139 : vector<64x16xf32>
    %141 = arith.truncf %140 : vector<64x16xf32> to vector<64x16xbf16>
    %c112_59 = arith.constant 112 : index
    %c0_60 = arith.constant 0 : index
    %142 = vector.load %arg5[%c112_59, %c0_60] : memref<144x16xbf16, #tpu.memory_space<vmem>>, vector<16x16xbf16>
    %cst_61 = arith.constant dense<0.000000e+00> : vector<64x16xf32>
    %143 = tpu.matmul %141, %142, %cst_61 {dimension_numbers = #tpu.dot_dimension_numbers<[1], [0], [0], [1], [0, 0, 1, 1], [], []>} : vector<64x16xbf16>, vector<16x16xbf16>, vector<64x16xf32> -> vector<64x16xf32>
    %144 = arith.addf %136, %143 : vector<64x16xf32>
    %c55_i32_62 = arith.constant 55 : i32
    %145 = tpu.dynamic_rotate %84 by %c55_i32_62 dim 0 : vector<64x16xf32>, i32 -> vector<64x16xf32>
    %146 = vector.extract_strided_slice %2 {offsets = [0, 8], sizes = [64, 1], strides = [1, 1]} : vector<64x9xf32> to vector<64x1xf32>
    %147 = vector.broadcast %146 : vector<64x1xf32> to vector<64x16xf32>
    %148 = arith.mulf %145, %147 : vector<64x16xf32>
    %149 = arith.truncf %148 : vector<64x16xf32> to vector<64x16xbf16>
    %c128_63 = arith.constant 128 : index
    %c0_64 = arith.constant 0 : index
    %150 = vector.load %arg5[%c128_63, %c0_64] : memref<144x16xbf16, #tpu.memory_space<vmem>>, vector<16x16xbf16>
    %cst_65 = arith.constant dense<0.000000e+00> : vector<64x16xf32>
    %151 = tpu.matmul %149, %150, %cst_65 {dimension_numbers = #tpu.dot_dimension_numbers<[1], [0], [0], [1], [0, 0, 1, 1], [], []>} : vector<64x16xbf16>, vector<16x16xbf16>, vector<64x16xf32> -> vector<64x16xf32>
    %152 = arith.addf %144, %151 : vector<64x16xf32>
    %153 = vector.broadcast %85 : vector<1x16xf32> to vector<64x16xf32>
    %154 = arith.addf %152, %153 : vector<64x16xf32>
    %cst_66 = arith.constant 0.000000e+00 : f32
    %155 = vector.broadcast %cst_66 : f32 to vector<64x16xf32>
    %156 = arith.maximumf %154, %155 : vector<64x16xf32>
    %157 = arith.truncf %156 : vector<64x16xf32> to vector<64x16xbf16>
    %158 = tpu.concatenate %157, %0 in 1 : vector<64x16xbf16>, vector<64x32xbf16> -> vector<64x48xbf16>
    %c0_67 = arith.constant 0 : index
    %c0_68 = arith.constant 0 : index
    %159 = vector.load %arg6[%c0_67, %c0_68] : memref<48x16xbf16, #tpu.memory_space<vmem>>, vector<48x16xbf16>
    %cst_69 = arith.constant dense<0.000000e+00> : vector<64x16xf32>
    %160 = tpu.matmul %158, %159, %cst_69 {dimension_numbers = #tpu.dot_dimension_numbers<[1], [0], [0], [1], [0, 0, 1, 1], [], []>} : vector<64x48xbf16>, vector<48x16xbf16>, vector<64x16xf32> -> vector<64x16xf32>
    %c3 = arith.constant 3 : index
    %c0_70 = arith.constant 0 : index
    %161 = vector.load %arg7[%c3, %c0_70] : memref<4x16xf32, #tpu.memory_space<vmem>>, vector<1x16xf32>
    %162 = vector.broadcast %161 : vector<1x16xf32> to vector<64x16xf32>
    %163 = arith.addf %160, %162 : vector<64x16xf32>
    %164 = vector.extract_strided_slice %163 {offsets = [0, 0], sizes = [8, 16], strides = [1, 1]} : vector<64x16xf32> to vector<8x16xf32>
    %c0_71 = arith.constant 0 : index
    %c0_72 = arith.constant 0 : index
    %165 = vector.load %arg8[%c0_71, %c0_72] : memref<8x128xf32, #tpu.memory_space<vmem>>, vector<8x16xf32>
    tpu.vector_store %arg8[%c0_71, %c0_72], %164 {strides = array<i32>} : memref<8x128xf32, #tpu.memory_space<vmem>>, vector<8x16xf32>,
    %166 = vector.extract_strided_slice %163 {offsets = [8, 0], sizes = [8, 16], strides = [1, 1]} : vector<64x16xf32> to vector<8x16xf32>
    %c0_73 = arith.constant 0 : index
    %c16_74 = arith.constant 16 : index
    %167 = vector.load %arg8[%c0_73, %c16_74] : memref<8x128xf32, #tpu.memory_space<vmem>>, vector<8x16xf32>
    tpu.vector_store %arg8[%c0_73, %c16_74], %166 {strides = array<i32>} : memref<8x128xf32, #tpu.memory_space<vmem>>, vector<8x16xf32>,
    %168 = vector.extract_strided_slice %163 {offsets = [16, 0], sizes = [8, 16], strides = [1, 1]} : vector<64x16xf32> to vector<8x16xf32>
    %c0_75 = arith.constant 0 : index
    %c32_76 = arith.constant 32 : index
    %169 = vector.load %arg8[%c0_75, %c32_76] : memref<8x128xf32, #tpu.memory_space<vmem>>, vector<8x16xf32>
    tpu.vector_store %arg8[%c0_75, %c32_76], %168 {strides = array<i32>} : memref<8x128xf32, #tpu.memory_space<vmem>>, vector<8x16xf32>,
    %170 = vector.extract_strided_slice %163 {offsets = [24, 0], sizes = [8, 16], strides = [1, 1]} : vector<64x16xf32> to vector<8x16xf32>
    %c0_77 = arith.constant 0 : index
    %c48_78 = arith.constant 48 : index
    %171 = vector.load %arg8[%c0_77, %c48_78] : memref<8x128xf32, #tpu.memory_space<vmem>>, vector<8x16xf32>
    tpu.vector_store %arg8[%c0_77, %c48_78], %170 {strides = array<i32>} : memref<8x128xf32, #tpu.memory_space<vmem>>, vector<8x16xf32>,
    %172 = vector.extract_strided_slice %163 {offsets = [32, 0], sizes = [8, 16], strides = [1, 1]} : vector<64x16xf32> to vector<8x16xf32>
    %c0_79 = arith.constant 0 : index
    %c64_80 = arith.constant 64 : index
    %173 = vector.load %arg8[%c0_79, %c64_80] : memref<8x128xf32, #tpu.memory_space<vmem>>, vector<8x16xf32>
    tpu.vector_store %arg8[%c0_79, %c64_80], %172 {strides = array<i32>} : memref<8x128xf32, #tpu.memory_space<vmem>>, vector<8x16xf32>,
    %174 = vector.extract_strided_slice %163 {offsets = [40, 0], sizes = [8, 16], strides = [1, 1]} : vector<64x16xf32> to vector<8x16xf32>
    %c0_81 = arith.constant 0 : index
    %c80_82 = arith.constant 80 : index
    %175 = vector.load %arg8[%c0_81, %c80_82] : memref<8x128xf32, #tpu.memory_space<vmem>>, vector<8x16xf32>
    tpu.vector_store %arg8[%c0_81, %c80_82], %174 {strides = array<i32>} : memref<8x128xf32, #tpu.memory_space<vmem>>, vector<8x16xf32>,
    %176 = vector.extract_strided_slice %163 {offsets = [48, 0], sizes = [8, 16], strides = [1, 1]} : vector<64x16xf32> to vector<8x16xf32>
    %c0_83 = arith.constant 0 : index
    %c96_84 = arith.constant 96 : index
    %177 = vector.load %arg8[%c0_83, %c96_84] : memref<8x128xf32, #tpu.memory_space<vmem>>, vector<8x16xf32>
    tpu.vector_store %arg8[%c0_83, %c96_84], %176 {strides = array<i32>} : memref<8x128xf32, #tpu.memory_space<vmem>>, vector<8x16xf32>,
    %178 = vector.extract_strided_slice %163 {offsets = [56, 0], sizes = [8, 16], strides = [1, 1]} : vector<64x16xf32> to vector<8x16xf32>
    %c0_85 = arith.constant 0 : index
    %c112_86 = arith.constant 112 : index
    %179 = vector.load %arg8[%c0_85, %c112_86] : memref<8x128xf32, #tpu.memory_space<vmem>>, vector<8x16xf32>
    tpu.vector_store %arg8[%c0_85, %c112_86], %178 {strides = array<i32>} : memref<8x128xf32, #tpu.memory_space<vmem>>, vector<8x16xf32>,
    return
  }
  func.func @transform_0(%arg0: i32) -> (i32, i32) {
    %c0_i32 = arith.constant 0 : i32
    %c0_i32_0 = arith.constant 0 : i32
    return %arg0, %c0_i32 : i32, i32
  }
  func.func @transform_1(%arg0: i32) -> (i32, i32) {
    %c0_i32 = arith.constant 0 : i32
    %c0_i32_0 = arith.constant 0 : i32
    %c0_i32_1 = arith.constant 0 : i32
    return %c0_i32, %c0_i32_0 : i32, i32
  }
  func.func @transform_2(%arg0: i32) -> (i32, i32) {
    %c0_i32 = arith.constant 0 : i32
    %c0_i32_0 = arith.constant 0 : i32
    %c0_i32_1 = arith.constant 0 : i32
    return %c0_i32, %c0_i32_0 : i32, i32
  }
  func.func @transform_3(%arg0: i32) -> (i32, i32) {
    %c0_i32 = arith.constant 0 : i32
    %c0_i32_0 = arith.constant 0 : i32
    %c0_i32_1 = arith.constant 0 : i32
    return %c0_i32, %c0_i32_0 : i32, i32
  }
  func.func @transform_4(%arg0: i32) -> (i32, i32) {
    %c0_i32 = arith.constant 0 : i32
    %c0_i32_0 = arith.constant 0 : i32
    %c0_i32_1 = arith.constant 0 : i32
    return %c0_i32, %c0_i32_0 : i32, i32
  }
  func.func @transform_5(%arg0: i32) -> (i32, i32) {
    %c0_i32 = arith.constant 0 : i32
    %c0_i32_0 = arith.constant 0 : i32
    %c0_i32_1 = arith.constant 0 : i32
    return %c0_i32, %c0_i32_0 : i32, i32
  }
  func.func @transform_6(%arg0: i32) -> (i32, i32) {
    %c0_i32 = arith.constant 0 : i32
    %c0_i32_0 = arith.constant 0 : i32
    %c0_i32_1 = arith.constant 0 : i32
    return %c0_i32, %c0_i32_0 : i32, i32
  }
  func.func @transform_7(%arg0: i32) -> (i32, i32) {
    %c0_i32 = arith.constant 0 : i32
    %c0_i32_0 = arith.constant 0 : i32
    return %arg0, %c0_i32 : i32, i32
  }
}

</mosaic_0001>

<llo_original>
// kernel: tpu_custom_call.1
$region0: #{tpu_custom_call.1}
  #allocation0 [shape = 'u32[]', space=smem, size = 0x4, offset = 0x4, fixed_abs, tag = 'smem constant byte address 0x4 - core index']
  #allocation1 [shape = 'u32[72,128]{1,0:T(1,128)}', space=vmem, size = 0x9000, scoped, tag = 'internal scratch']
  %s0 = inlined_call_operand.vmem [shape: bf16[128,32], index: 0, kind: input, shape index: {}]
  %s1 = inlined_call_operand.vmem [shape: f32[64,9], index: 1, kind: input, shape index: {}]
  %s2 = inlined_call_operand.vmem [shape: bf16[32,16], index: 2, kind: input, shape index: {}]
  %s3 = inlined_call_operand.vmem [shape: bf16[144,16], index: 3, kind: input, shape index: {}]
  %s4 = inlined_call_operand.vmem [shape: bf16[144,16], index: 4, kind: input, shape index: {}]
  %s5 = inlined_call_operand.vmem [shape: bf16[48,16], index: 5, kind: input, shape index: {}]
  %s6 = inlined_call_operand.vmem [shape: f32[4,16], index: 6, kind: input, shape index: {}]
  %s7 = inlined_call_operand.hbm [shape: f32[16,128], index: 7, kind: output, shape index: {}]
  %s8 = sld [smem:[#allocation0]]
  $region61: #{tpu_custom_call.1} parent=0
    _
  %s10 = ssub.s32 1, %s8
  %s11 = scalar_select 0, %s10, %s8
  $region1: #{tpu_custom_call.1} parent=0
    #allocation2 [shape = 'u8[8192]{0}', space=vmem, size = 0x2000, scoped, tag = 'output window, operand 0']
    #allocation3 [shape = 's32[2]{0}', space=sflag, size = 0x8, scoped, tag = 'scoped memory for tpu_custom_call.1']
    %12 = vsyncpa [#allocation3], 0
    %s13 = scalar_lea.sflag [#allocation3], 1
    %14 = vsyncpa %s13, 0
    loop: start=0, step=1, limit=4
    $region2: #{tpu_custom_call.1} parent=1 // loop_pre_header
      _
    $region3: #{tpu_custom_call.1} parent=1 // loop_header
      %s16 = sphi 0, %s20
      %p17 = scmp.ge.s32.totalorder %s16, 4
      %s26 = sphi 0, %s28
      %s29 = sphi 0, %s26
      %s30 = sphi 0, %s29
      %s46 = sphi 0, %s30
      %s50 = sphi 0, %s50
      %s52 = sphi 0, %s50
      %s53 = sphi 0, %s52
      %s67 = sphi 0, %s53
      %s71 = sphi 0, %s71
      %s73 = sphi 0, %s71
      %s74 = sphi 0, %s73
      %s88 = sphi 0, %s74
      %s92 = sphi 0, %s92
      %s94 = sphi 0, %s92
      %s95 = sphi 0, %s94
      %s109 = sphi 0, %s95
      %s113 = sphi 0, %s113
      %s115 = sphi 0, %s113
      %s116 = sphi 0, %s115
      %s130 = sphi 0, %s116
      %s134 = sphi 0, %s134
      %s136 = sphi 0, %s134
      %s137 = sphi 0, %s136
      %s151 = sphi 0, %s137
      %s155 = sphi 0, %s155
      %s157 = sphi 0, %s155
      %s158 = sphi 0, %s157
      %s172 = sphi 0, %s158
      %s178 = sphi 0, %s180
      %s181 = sphi 0, %s178
      %s182 = sphi 0, %s181
      %s198 = sphi 0, %s182
    $region4: #{tpu_custom_call.1} parent=1 // loop_header_branch
      %19 = sbr.rel (%p17) target = $region8
    $region5: #{tpu_custom_call.1} parent=1 // loop_body
      %s21 = ssub.s32 %s16, 1
      %s22 = ssub.s32 %s16, 2
      %s23 = sadd.s32 %s16, 1
      %s24 = ssub.s32 %s16, %s23
      %p25 = scmp.eq.s32.totalorder %s24, 0
      %s27 = sadd.s32 %s26, 1
      %s28 = scalar_select %p25, %s26, %s27
      %p31 = pneg %p25
      %p32 = scmp.eq.s32.totalorder %s16, 1
      %p33 = por %p31, %p32
      %p34 = scmp.ne.s32.totalorder %s26, %s29
      %p35 = scmp.eq.s32.totalorder %s16, 0
      %p36 = por %p34, %p35
      %p37 = scmp.ne.s32.totalorder %s26, %s29
      %p38 = scmp.eq.s32.totalorder %s21, 1
      %p39 = por %p37, %p38
      %p40 = scmp.ne.s32.totalorder %s29, %s30
      %p41 = scmp.eq.s32.totalorder %s21, 0
      %p42 = por %p40, %p41
      %p43 = scmp.ne.s32.totalorder %s29, %s30
      %p44 = scmp.eq.s32.totalorder %s22, 1
      %p45 = por %p43, %p44
      %p47 = scmp.ne.s32.totalorder %s30, %s46
      %p48 = scmp.eq.s32.totalorder %s22, 0
      %p49 = por %p47, %p48
      %s51 = sadd.s32 %s50, 1
      %p54 = scmp.eq.s32.totalorder %s16, 1
      %p55 = scmp.ne.s32.totalorder %s50, %s52
      %p56 = scmp.eq.s32.totalorder %s16, 0
      %p57 = por %p55, %p56
      %p58 = scmp.ne.s32.totalorder %s50, %s52
      %p59 = scmp.eq.s32.totalorder %s21, 1
      %p60 = por %p58, %p59
      %p61 = scmp.ne.s32.totalorder %s52, %s53
      %p62 = scmp.eq.s32.totalorder %s21, 0
      %p63 = por %p61, %p62
      %p64 = scmp.ne.s32.totalorder %s52, %s53
      %p65 = scmp.eq.s32.totalorder %s22, 1
      %p66 = por %p64, %p65
      %p68 = scmp.ne.s32.totalorder %s53, %s67
      %p69 = scmp.eq.s32.totalorder %s22, 0
      %p70 = por %p68, %p69
      %s72 = sadd.s32 %s71, 1
      %p75 = scmp.eq.s32.totalorder %s16, 1
      %p76 = scmp.ne.s32.totalorder %s71, %s73
      %p77 = scmp.eq.s32.totalorder %s16, 0
      %p78 = por %p76, %p77
      %p79 = scmp.ne.s32.totalorder %s71, %s73
      %p80 = scmp.eq.s32.totalorder %s21, 1
      %p81 = por %p79, %p80
      %p82 = scmp.ne.s32.totalorder %s73, %s74
      %p83 = scmp.eq.s32.totalorder %s21, 0
      %p84 = por %p82, %p83
      %p85 = scmp.ne.s32.totalorder %s73, %s74
      %p86 = scmp.eq.s32.totalorder %s22, 1
      %p87 = por %p85, %p86
      %p89 = scmp.ne.s32.totalorder %s74, %s88
      %p90 = scmp.eq.s32.totalorder %s22, 0
      %p91 = por %p89, %p90
      %s93 = sadd.s32 %s92, 1
      %p96 = scmp.eq.s32.totalorder %s16, 1
      %p97 = scmp.ne.s32.totalorder %s92, %s94
      %p98 = scmp.eq.s32.totalorder %s16, 0
      %p99 = por %p97, %p98
      %p100 = scmp.ne.s32.totalorder %s92, %s94
      %p101 = scmp.eq.s32.totalorder %s21, 1
      %p102 = por %p100, %p101
      %p103 = scmp.ne.s32.totalorder %s94, %s95
      %p104 = scmp.eq.s32.totalorder %s21, 0
      %p105 = por %p103, %p104
      %p106 = scmp.ne.s32.totalorder %s94, %s95
      %p107 = scmp.eq.s32.totalorder %s22, 1
      %p108 = por %p106, %p107
      %p110 = scmp.ne.s32.totalorder %s95, %s109
      %p111 = scmp.eq.s32.totalorder %s22, 0
      %p112 = por %p110, %p111
      %s114 = sadd.s32 %s113, 1
      %p117 = scmp.eq.s32.totalorder %s16, 1
      %p118 = scmp.ne.s32.totalorder %s113, %s115
      %p119 = scmp.eq.s32.totalorder %s16, 0
      %p120 = por %p118, %p119
      %p121 = scmp.ne.s32.totalorder %s113, %s115
      %p122 = scmp.eq.s32.totalorder %s21, 1
      %p123 = por %p121, %p122
      %p124 = scmp.ne.s32.totalorder %s115, %s116
      %p125 = scmp.eq.s32.totalorder %s21, 0
      %p126 = por %p124, %p125
      %p127 = scmp.ne.s32.totalorder %s115, %s116
      %p128 = scmp.eq.s32.totalorder %s22, 1
      %p129 = por %p127, %p128
      %p131 = scmp.ne.s32.totalorder %s116, %s130
      %p132 = scmp.eq.s32.totalorder %s22, 0
      %p133 = por %p131, %p132
      %s135 = sadd.s32 %s134, 1
      %p138 = scmp.eq.s32.totalorder %s16, 1
      %p139 = scmp.ne.s32.totalorder %s134, %s136
      %p140 = scmp.eq.s32.totalorder %s16, 0
      %p141 = por %p139, %p140
      %p142 = scmp.ne.s32.totalorder %s134, %s136
      %p143 = scmp.eq.s32.totalorder %s21, 1
      %p144 = por %p142, %p143
      %p145 = scmp.ne.s32.totalorder %s136, %s137
      %p146 = scmp.eq.s32.totalorder %s21, 0
      %p147 = por %p145, %p146
      %p148 = scmp.ne.s32.totalorder %s136, %s137
      %p149 = scmp.eq.s32.totalorder %s22, 1
      %p150 = por %p148, %p149
      %p152 = scmp.ne.s32.totalorder %s137, %s151
      %p153 = scmp.eq.s32.totalorder %s22, 0
      %p154 = por %p152, %p153
      %s156 = sadd.s32 %s155, 1
      %p159 = scmp.eq.s32.totalorder %s16, 1
      %p160 = scmp.ne.s32.totalorder %s155, %s157
      %p161 = scmp.eq.s32.totalorder %s16, 0
      %p162 = por %p160, %p161
      %p163 = scmp.ne.s32.totalorder %s155, %s157
      %p164 = scmp.eq.s32.totalorder %s21, 1
      %p165 = por %p163, %p164
      %p166 = scmp.ne.s32.totalorder %s157, %s158
      %p167 = scmp.eq.s32.totalorder %s21, 0
      %p168 = por %p166, %p167
      %p169 = scmp.ne.s32.totalorder %s157, %s158
      %p170 = scmp.eq.s32.totalorder %s22, 1
      %p171 = por %p169, %p170
      %p173 = scmp.ne.s32.totalorder %s158, %s172
      %p174 = scmp.eq.s32.totalorder %s22, 0
      %p175 = por %p173, %p174
      %s176 = ssub.s32 %s16, %s23
      %p177 = scmp.eq.s32.totalorder %s176, 0
      %s179 = sadd.s32 %s178, 1
      %s180 = scalar_select %p177, %s178, %s179
      %p183 = pneg %p177
      %p184 = scmp.eq.s32.totalorder %s16, 1
      %p185 = por %p183, %p184
      %p186 = scmp.ne.s32.totalorder %s178, %s181
      %p187 = scmp.eq.s32.totalorder %s16, 0
      %p188 = por %p186, %p187
      %p189 = scmp.ne.s32.totalorder %s178, %s181
      %p190 = scmp.eq.s32.totalorder %s21, 1
      %p191 = por %p189, %p190
      %p192 = scmp.ne.s32.totalorder %s181, %s182
      %p193 = scmp.eq.s32.totalorder %s21, 0
      %p194 = por %p192, %p193
      %p195 = scmp.ne.s32.totalorder %s181, %s182
      %p196 = scmp.eq.s32.totalorder %s22, 1
      %p197 = por %p195, %p196
      %p199 = scmp.ne.s32.totalorder %s182, %s198
      %p200 = scmp.eq.s32.totalorder %s22, 0
      %p201 = por %p199, %p200
      %p202 = scmp.le.s32.totalorder 1, %s16
      %p203 = scmp.lt.s32.totalorder %s16, 3
      %p204 = pnand %p202, %p203
      %p205 = pneg %p204
      // Predicated region
      $region9: #{tpu_custom_call.1} parent=5 // pred_check
        _
      $region10: #{tpu_custom_call.1} parent=5 // pred_check_branch
        %207 = sbr.rel (%p204) target = $region12
      $region11: #{tpu_custom_call.1} parent=5 // pred_region
        %s208 = ssub.s32 %s16, 1
        // Predicated region
        $region13: #{tpu_custom_call.1} parent=11 // pred_check
          %p209 = pneg %p63
        $region14: #{tpu_custom_call.1} parent=11 // pred_check_branch
          %211 = sbr.rel (%p209) target = $region16
        $region15: #{tpu_custom_call.1} parent=11 // pred_region
          _
        $region16: #{tpu_custom_call.1} parent=11 // pred_fallthru
          _
        // Predicated region
        $region17: #{tpu_custom_call.1} parent=11 // pred_check
          %p212 = pneg %p84
        $region18: #{tpu_custom_call.1} parent=11 // pred_check_branch
          %214 = sbr.rel (%p212) target = $region20
        $region19: #{tpu_custom_call.1} parent=11 // pred_region
          _
        $region20: #{tpu_custom_call.1} parent=11 // pred_fallthru
          _
        // Predicated region
        $region21: #{tpu_custom_call.1} parent=11 // pred_check
          %p215 = pneg %p105
        $region22: #{tpu_custom_call.1} parent=11 // pred_check_branch
          %217 = sbr.rel (%p215) target = $region24
        $region23: #{tpu_custom_call.1} parent=11 // pred_region
          _
        $region24: #{tpu_custom_call.1} parent=11 // pred_fallthru
          _
        // Predicated region
        $region25: #{tpu_custom_call.1} parent=11 // pred_check
          %p218 = pneg %p126
        $region26: #{tpu_custom_call.1} parent=11 // pred_check_branch
          %220 = sbr.rel (%p218) target = $region28
        $region27: #{tpu_custom_call.1} parent=11 // pred_region
          _
        $region28: #{tpu_custom_call.1} parent=11 // pred_fallthru
          _
        // Predicated region
        $region29: #{tpu_custom_call.1} parent=11 // pred_check
          %p221 = pneg %p147
        $region30: #{tpu_custom_call.1} parent=11 // pred_check_branch
          %223 = sbr.rel (%p221) target = $region32
        $region31: #{tpu_custom_call.1} parent=11 // pred_region
          _
        $region32: #{tpu_custom_call.1} parent=11 // pred_fallthru
          _
        // Predicated region
        $region33: #{tpu_custom_call.1} parent=11 // pred_check
          %p224 = pneg %p168
        $region34: #{tpu_custom_call.1} parent=11 // pred_check_branch
          %226 = sbr.rel (%p224) target = $region36
        $region35: #{tpu_custom_call.1} parent=11 // pred_region
          _
        $region36: #{tpu_custom_call.1} parent=11 // pred_fallthru
          _
      $region12: #{tpu_custom_call.1} parent=5 // pred_fallthru
        _
      %p227 = scmp.lt.s32.totalorder %s16, 2
      // Predicated region
      $region37: #{tpu_custom_call.1} parent=5 // pred_check
        %p228 = pneg %p227
      $region38: #{tpu_custom_call.1} parent=5 // pred_check_branch
        %230 = sbr.rel (%p228) target = $region40
      $region39: #{tpu_custom_call.1} parent=5 // pred_region
        // Predicated region
        $region41: #{tpu_custom_call.1} parent=39 // pred_check
          %p231 = pneg %p36
        $region42: #{tpu_custom_call.1} parent=39 // pred_check_branch
          %233 = sbr.rel (%p231) target = $region44
        $region43: #{tpu_custom_call.1} parent=39 // pred_region
          %s234 = smul.u32 8, %s16
          %p235 = scmp.lt.s32.totalorder %s234, 15
          %s236 = scalar_select %p235, %s234, 15
          %s237 = smul.addr %s236, 4
          %s238 = scalar_lea.vmem %s0, %s237
          %s239 = smul.u32 8, %s16
        $region44: #{tpu_custom_call.1} parent=39 // pred_fallthru
          _
      $region40: #{tpu_custom_call.1} parent=5 // pred_fallthru
        _
      %p240 = scmp.le.s32.totalorder 1, %s16
      %p241 = scmp.lt.s32.totalorder %s16, 3
      %p242 = pnand %p240, %p241
      %p243 = pneg %p242
      // Predicated region
      $region45: #{tpu_custom_call.1} parent=5 // pred_check
        _
      $region46: #{tpu_custom_call.1} parent=5 // pred_check_branch
        %245 = sbr.rel (%p242) target = $region48
      $region47: #{tpu_custom_call.1} parent=5 // pred_region
        %s246 = ssub.s32 %s16, 1
        %s247 = smul.u32 8, %s21
        %p248 = scmp.lt.s32.totalorder %s247, 15
        %s249 = scalar_select %p248, %s247, 15
        %s250 = smul.addr %s249, 4
        %s251 = scalar_lea.vmem %s0, %s250
        %p252 = pneg %p42
        %p253 = pneg %p39
        %p254 = pneg %p63
        %p255 = pneg %p60
        %p256 = pneg %p84
        %p257 = pneg %p81
        %p258 = pneg %p105
        %p259 = pneg %p102
        %p260 = pneg %p126
        %p261 = pneg %p123
        %p262 = pneg %p147
        %p263 = pneg %p144
        %p264 = pneg %p168
        %p265 = pneg %p165
        %p266 = pneg %p194
        %p267 = pneg %p191
        %s268 = sand.u32 %s181, 1
        %s269 = scalar_lea.sflag [#allocation3], %s268
        %s270 = sand.u32 %s181, 1
        %s271 = smul.addr %s270, 8
        %s272 = scalar_lea.vmem [#allocation2], %s271
        %s273 = smul.u32 8, %s21
        %p274 = scmp.lt.s32.totalorder %s273, 15
        %s275 = scalar_select %p274, %s273, 15
        %s276 = smul.addr %s275, 4
        %s277 = scalar_lea.vmem %s0, %s276
        %s278 = smul.u32 8, %s21
        %v280 = vld [vmem:[%s277] sm:$0xf]
        %v281 = vld [vmem:[%s277 + $0x4] sm:$0xf]
        %v282 = vld [vmem:[%s277 + $0x8] sm:$0xf]
        %v283 = vld [vmem:[%s277 + $0xc] sm:$0xf]
        %v284 = vld [vmem:[%s277 + $0x10] sm:$0xf]
        %v285 = vld [vmem:[%s277 + $0x14] sm:$0xf]
        %v286 = vld [vmem:[%s277 + $0x18] sm:$0xf]
        %v287 = vld [vmem:[%s277 + $0x1c] sm:$0xf]
        %v288 = vunpack.c.l.bf16 %v280
        %v289 = vunpack.c.l.bf16 %v281
        %v290 = vunpack.c.l.bf16 %v282
        %v291 = vunpack.c.l.bf16 %v283
        %v292 = vunpack.c.l.bf16 %v284
        %v293 = vunpack.c.l.bf16 %v285
        %v294 = vunpack.c.l.bf16 %v286
        %v295 = vunpack.c.l.bf16 %v287
        %v296 = vld [vmem:[%s1] sm:$0xff]
        %v297 = vld [vmem:[%s1 + $0x8] sm:$0xff]
        %v298 = vld [vmem:[%s1 + $0x10] sm:$0xff]
        %v299 = vld [vmem:[%s1 + $0x18] sm:$0xff]
        %v300 = vld [vmem:[%s1 + $0x20] sm:$0xff]
        %v301 = vld [vmem:[%s1 + $0x28] sm:$0xff]
        %v302 = vld [vmem:[%s1 + $0x30] sm:$0xff]
        %v303 = vld [vmem:[%s1 + $0x38] sm:$0xff]
        %v304 = vmax.f32 %v288, 0.0
        %v305 = vmax.f32 %v289, 0.0
        %v306 = vmax.f32 %v290, 0.0
        %v307 = vmax.f32 %v291, 0.0
        %v308 = vmax.f32 %v292, 0.0
        %v309 = vmax.f32 %v293, 0.0
        %v310 = vmax.f32 %v294, 0.0
        %v311 = vmax.f32 %v295, 0.0
        %v312 = vpack.c.bf16 %v305, %v304
        %v313 = vpack.c.bf16 %v307, %v306
        %v314 = vpack.c.bf16 %v309, %v308
        %v315 = vpack.c.bf16 %v311, %v310
        %v316 = vld [vmem:[%s2] sm:$0xf]
        %v317 = vld [vmem:[%s2 + $0x4] sm:$0xf]
        %v318 = vld [vmem:[%s2 + $0x8] sm:$0xf]
        %v319 = vld [vmem:[%s2 + $0xc] sm:$0xf]
        %v320 = vld [vmem:[%s6] sm:$0x1]
        %v321 = vperm.slane %v320, 0
        %v326 = vunpack.c.l.b16 %v316
        %v327 = vunpack.c.l.b16 %v317
        %v328 = vunpack.c.l.b16 %v318
        %v329 = vunpack.c.l.b16 %v319
        %v330 = vpack.c.b16 %v327, %v326
        %v331 = vpack.c.b16 %v329, %v328
        %vm334 = vcmask 261120
        %v336 = vsel %vm334, %v312, 0
        %v339 = vsel %vm334, %v313, 0
        %v342 = vsel %vm334, %v314, 0
        %v345 = vsel %vm334, %v315, 0
        %347 = vmatpush.bf16.msra.mxu0 0
        %348 = vmatpush.bf16.msra.mxu0 0
        %349 = vmatpush.bf16.msra.mxu0 0
        %350 = vmatpush.bf16.msra.mxu0 0
        %351 = vmatpush.bf16.msra.mxu0 0
        %352 = vmatpush.bf16.msra.mxu0 0
        %353 = vmatpush.bf16.msra.mxu0 %v331
        %354 = vmatpush.bf16.msra.mxu0 %v330
        %355 = vmatmul.bf16.gmra.mxu0 %v336
        %v356 = vpop.f32.mrf.mxu0
        %v357 = vadd.f32 %v321, %v356
        %v358 = vpop.f32.mrf.mxu0
        %v359 = vadd.f32 %v321, %v358
        %360 = vmatmul.bf16.gmra.mxu0 %v339
        %v361 = vpop.f32.mrf.mxu0
        %v362 = vadd.f32 %v321, %v361
        %v363 = vpop.f32.mrf.mxu0
        %v364 = vadd.f32 %v321, %v363
        %365 = vmatmul.bf16.gmra.mxu0 %v342
        %v366 = vpop.f32.mrf.mxu0
        %v367 = vadd.f32 %v321, %v366
        %v368 = vpop.f32.mrf.mxu0
        %v369 = vadd.f32 %v321, %v368
        %370 = vmatmul.bf16.gmra.mxu0 %v345
        %v371 = vpop.f32.mrf.mxu0
        %v372 = vadd.f32 %v321, %v371
        %v373 = vpop.f32.mrf.mxu0
        %v374 = vadd.f32 %v321, %v373
        %375 = vdwg.mxu0
        %v376 = vmax.f32 %v357, 0.0
        %v377 = vmax.f32 %v359, 0.0
        %v378 = vmax.f32 %v362, 0.0
        %v379 = vmax.f32 %v364, 0.0
        %v380 = vmax.f32 %v367, 0.0
        %v381 = vmax.f32 %v369, 0.0
        %v382 = vmax.f32 %v372, 0.0
        %v383 = vmax.f32 %v374, 0.0
        %v384 = vld [vmem:[%s6 + $0x1] sm:$0x1]
        %v385 = vpack.c.bf16 %v377, %v376
        %v386 = vpack.c.bf16 %v379, %v378
        %v387 = vpack.c.bf16 %v381, %v380
        %v388 = vpack.c.bf16 %v383, %v382
        %v389 = vld [vmem:[%s3 + $0x20] sm:$0xf]
        %v390 = vld [vmem:[%s3 + $0x24] sm:$0xf]
        %v391 = vrot.slane %v376, 7
        %v392 = vrot.slane %v377, 7
        %v393 = vrot.slane %v378, 7
        %v394 = vrot.slane %v379, 7
        %v395 = vrot.slane %v380, 7
        %v396 = vrot.slane %v381, 7
        %v397 = vrot.slane %v382, 7
        %v398 = vrot.slane %v383, 7
        %v399 = vlaneseq
        %v400 = vshrl.u32 %v399, 7
        %vm401 = vcmp.lt.s32.totalorder %v400, 1
        %v402 = vsel %vm401, %v397, %v398
        %v403 = vsel %vm401, %v396, %v397
        %v404 = vsel %vm401, %v395, %v396
        %v405 = vsel %vm401, %v394, %v395
        %v406 = vsel %vm401, %v393, %v394
        %v407 = vsel %vm401, %v392, %v393
        %v408 = vsel %vm401, %v391, %v392
        %v409 = vsel %vm401, %v398, %v391
        %411 = vset.pattern.permute.xlu0 0
        %412 = vperm.xlu0 %411, %v296
        %v413 = vpop.permute.xlu0 %412
        %416 = vset.pattern.permute.xlu0 0
        %417 = vperm.xlu0 %416, %v297
        %v418 = vpop.permute.xlu0 %417
        %421 = vset.pattern.permute.xlu0 0
        %422 = vperm.xlu0 %421, %v298
        %v423 = vpop.permute.xlu0 %422
        %426 = vset.pattern.permute.xlu0 0
        %427 = vperm.xlu0 %426, %v299
        %v428 = vpop.permute.xlu0 %427
        %431 = vset.pattern.permute.xlu0 0
        %432 = vperm.xlu0 %431, %v300
        %v433 = vpop.permute.xlu0 %432
        %436 = vset.pattern.permute.xlu0 0
        %437 = vperm.xlu0 %436, %v301
        %v438 = vpop.permute.xlu0 %437
        %441 = vset.pattern.permute.xlu0 0
        %442 = vperm.xlu0 %441, %v302
        %v443 = vpop.permute.xlu0 %442
        %446 = vset.pattern.permute.xlu0 0
        %447 = vperm.xlu0 %446, %v303
        %v448 = vpop.permute.xlu0 %447
        %v450 = vmul.f32 %v402, %v413
        %v451 = vmul.f32 %v409, %v418
        %v452 = vmul.f32 %v408, %v423
        %v453 = vmul.f32 %v407, %v428
        %v454 = vmul.f32 %v406, %v433
        %v455 = vmul.f32 %v405, %v438
        %v456 = vmul.f32 %v404, %v443
        %v457 = vmul.f32 %v403, %v448
        %v458 = vpack.c.bf16 %v451, %v450
        %v459 = vpack.c.bf16 %v453, %v452
        %v460 = vpack.c.bf16 %v455, %v454
        %v461 = vpack.c.bf16 %v457, %v456
        %v462 = vld [vmem:[%s3] sm:$0xf]
        %v463 = vld [vmem:[%s3 + $0x4] sm:$0xf]
        %v466 = vunpack.c.l.b16 %v462
        %v467 = vunpack.c.l.b16 %v463
        %v468 = vpack.c.b16 %v467, %v466
        %vm470 = vcmask 130048
        %v472 = vsel %vm470, %v458, 0
        %v475 = vsel %vm470, %v459, 0
        %v478 = vsel %vm470, %v460, 0
        %v481 = vsel %vm470, %v461, 0
        %483 = vmatpush.bf16.msra.mxu0 0
        %484 = vmatpush.bf16.msra.mxu0 0
        %485 = vmatpush.bf16.msra.mxu0 0
        %486 = vmatpush.bf16.msra.mxu0 0
        %487 = vmatpush.bf16.msra.mxu0 0
        %488 = vmatpush.bf16.msra.mxu0 0
        %489 = vmatpush.bf16.msra.mxu0 0
        %490 = vmatpush.bf16.msra.mxu0 %v468
        %491 = vmatmul.bf16.gmra.mxu0 %v472
        %v492 = vpop.f32.mrf.mxu0
        %v493 = vadd.f32 0.0, %v492
        %v494 = vpop.f32.mrf.mxu0
        %v495 = vadd.f32 0.0, %v494
        %496 = vmatmul.bf16.gmra.mxu0 %v475
        %v497 = vpop.f32.mrf.mxu0
        %v498 = vadd.f32 0.0, %v497
        %v499 = vpop.f32.mrf.mxu0
        %v500 = vadd.f32 0.0, %v499
        %501 = vmatmul.bf16.gmra.mxu0 %v478
        %v502 = vpop.f32.mrf.mxu0
        %v503 = vadd.f32 0.0, %v502
        %v504 = vpop.f32.mrf.mxu0
        %v505 = vadd.f32 0.0, %v504
        %506 = vmatmul.bf16.gmra.mxu0 %v481
        %v507 = vpop.f32.mrf.mxu0
        %v508 = vadd.f32 0.0, %v507
        %v509 = vpop.f32.mrf.mxu0
        %v510 = vadd.f32 0.0, %v509
        %511 = vdwg.mxu0
        %v514 = vunpack.c.l.b16 %v389
        %v515 = vunpack.c.l.b16 %v390
        %v516 = vpack.c.b16 %v515, %v514
        %v519 = vsel %vm470, %v385, 0
        %v522 = vsel %vm470, %v386, 0
        %v525 = vsel %vm470, %v387, 0
        %v528 = vsel %vm470, %v388, 0
        %530 = vmatpush.bf16.msra.mxu0 0
        %531 = vmatpush.bf16.msra.mxu0 0
        %532 = vmatpush.bf16.msra.mxu0 0
        %533 = vmatpush.bf16.msra.mxu0 0
        %534 = vmatpush.bf16.msra.mxu0 0
        %535 = vmatpush.bf16.msra.mxu0 0
        %536 = vmatpush.bf16.msra.mxu0 0
        %537 = vmatpush.bf16.msra.mxu0 %v516
        %538 = vmatmul.bf16.gmra.mxu0 %v519
        %v539 = vpop.f32.mrf.mxu0
        %v540 = vadd.f32 %v493, %v539
        %v541 = vpop.f32.mrf.mxu0
        %v542 = vadd.f32 %v495, %v541
        %543 = vmatmul.bf16.gmra.mxu0 %v522
        %v544 = vpop.f32.mrf.mxu0
        %v545 = vadd.f32 %v498, %v544
        %v546 = vpop.f32.mrf.mxu0
        %v547 = vadd.f32 %v500, %v546
        %548 = vmatmul.bf16.gmra.mxu0 %v525
        %v549 = vpop.f32.mrf.mxu0
        %v550 = vadd.f32 %v503, %v549
        %v551 = vpop.f32.mrf.mxu0
        %v552 = vadd.f32 %v505, %v551
        %553 = vmatmul.bf16.gmra.mxu0 %v528
        %v554 = vpop.f32.mrf.mxu0
        %v555 = vadd.f32 %v508, %v554
        %v556 = vpop.f32.mrf.mxu0
        %v557 = vadd.f32 %v510, %v556
        %558 = vdwg.mxu0
        %559 = vset.pattern.permute.xlu0 1
        %560 = vperm.xlu0 %559, %v296
        %v561 = vpop.permute.xlu0 %560
        %563 = vset.pattern.permute.xlu0 1
        %564 = vperm.xlu0 %563, %v297
        %v565 = vpop.permute.xlu0 %564
        %567 = vset.pattern.permute.xlu0 1
        %568 = vperm.xlu0 %567, %v298
        %v569 = vpop.permute.xlu0 %568
        %571 = vset.pattern.permute.xlu0 1
        %572 = vperm.xlu0 %571, %v299
        %v573 = vpop.permute.xlu0 %572
        %575 = vset.pattern.permute.xlu0 1
        %576 = vperm.xlu0 %575, %v300
        %v577 = vpop.permute.xlu0 %576
        %579 = vset.pattern.permute.xlu0 1
        %580 = vperm.xlu0 %579, %v301
        %v581 = vpop.permute.xlu0 %580
        %583 = vset.pattern.permute.xlu0 1
        %584 = vperm.xlu0 %583, %v302
        %v585 = vpop.permute.xlu0 %584
        %587 = vset.pattern.permute.xlu0 1
        %588 = vperm.xlu0 %587, %v303
        %v589 = vpop.permute.xlu0 %588
        %v591 = vmul.f32 %v409, %v561
        %v592 = vmul.f32 %v408, %v565
        %v593 = vmul.f32 %v407, %v569
        %v594 = vmul.f32 %v406, %v573
        %v595 = vmul.f32 %v405, %v577
        %v596 = vmul.f32 %v404, %v581
        %v597 = vmul.f32 %v403, %v585
        %v598 = vmul.f32 %v402, %v589
        %v599 = vpack.c.bf16 %v592, %v591
        %v600 = vpack.c.bf16 %v594, %v593
        %v601 = vpack.c.bf16 %v596, %v595
        %v602 = vpack.c.bf16 %v598, %v597
        %v603 = vld [vmem:[%s3 + $0x8] sm:$0xf]
        %v604 = vld [vmem:[%s3 + $0xc] sm:$0xf]
        %v607 = vunpack.c.l.b16 %v603
        %v608 = vunpack.c.l.b16 %v604
        %v609 = vpack.c.b16 %v608, %v607
        %v612 = vsel %vm470, %v599, 0
        %v615 = vsel %vm470, %v600, 0
        %v618 = vsel %vm470, %v601, 0
        %v621 = vsel %vm470, %v602, 0
        %623 = vmatpush.bf16.msra.mxu0 0
        %624 = vmatpush.bf16.msra.mxu0 0
        %625 = vmatpush.bf16.msra.mxu0 0
        %626 = vmatpush.bf16.msra.mxu0 0
        %627 = vmatpush.bf16.msra.mxu0 0
        %628 = vmatpush.bf16.msra.mxu0 0
        %629 = vmatpush.bf16.msra.mxu0 0
        %630 = vmatpush.bf16.msra.mxu0 %v609
        %631 = vmatmul.bf16.gmra.mxu0 %v612
        %v632 = vpop.f32.mrf.mxu0
        %v633 = vadd.f32 0.0, %v632
        %v634 = vpop.f32.mrf.mxu0
        %v635 = vadd.f32 0.0, %v634
        %636 = vmatmul.bf16.gmra.mxu0 %v615
        %v637 = vpop.f32.mrf.mxu0
        %v638 = vadd.f32 0.0, %v637
        %v639 = vpop.f32.mrf.mxu0
        %v640 = vadd.f32 0.0, %v639
        %641 = vmatmul.bf16.gmra.mxu0 %v618
        %v642 = vpop.f32.mrf.mxu0
        %v643 = vadd.f32 0.0, %v642
        %v644 = vpop.f32.mrf.mxu0
        %v645 = vadd.f32 0.0, %v644
        %646 = vmatmul.bf16.gmra.mxu0 %v621
        %v647 = vpop.f32.mrf.mxu0
        %v648 = vadd.f32 0.0, %v647
        %v649 = vpop.f32.mrf.mxu0
        %v650 = vadd.f32 0.0, %v649
        %651 = vdwg.mxu0
        %v652 = vadd.f32 %v540, %v633
        %v653 = vadd.f32 %v542, %v635
        %v654 = vadd.f32 %v545, %v638
        %v655 = vadd.f32 %v547, %v640
        %v656 = vadd.f32 %v550, %v643
        %v657 = vadd.f32 %v552, %v645
        %v658 = vadd.f32 %v555, %v648
        %v659 = vadd.f32 %v557, %v650
        %660 = vset.pattern.permute.xlu0 2
        %661 = vperm.xlu0 %660, %v296
        %v662 = vpop.permute.xlu0 %661
        %664 = vset.pattern.permute.xlu0 2
        %665 = vperm.xlu0 %664, %v297
        %v666 = vpop.permute.xlu0 %665
        %668 = vset.pattern.permute.xlu0 2
        %669 = vperm.xlu0 %668, %v298
        %v670 = vpop.permute.xlu0 %669
        %672 = vset.pattern.permute.xlu0 2
        %673 = vperm.xlu0 %672, %v299
        %v674 = vpop.permute.xlu0 %673
        %676 = vset.pattern.permute.xlu0 2
        %677 = vperm.xlu0 %676, %v300
        %v678 = vpop.permute.xlu0 %677
        %680 = vset.pattern.permute.xlu0 2
        %681 = vperm.xlu0 %680, %v301
        %v682 = vpop.permute.xlu0 %681
        %684 = vset.pattern.permute.xlu0 2
        %685 = vperm.xlu0 %684, %v302
        %v686 = vpop.permute.xlu0 %685
        %688 = vset.pattern.permute.xlu0 2
        %689 = vperm.xlu0 %688, %v303
        %v690 = vpop.permute.xlu0 %689
        %v692 = vmul.f32 %v408, %v662
        %v693 = vmul.f32 %v407, %v666
        %v694 = vmul.f32 %v406, %v670
        %v695 = vmul.f32 %v405, %v674
        %v696 = vmul.f32 %v404, %v678
        %v697 = vmul.f32 %v403, %v682
        %v698 = vmul.f32 %v402, %v686
        %v699 = vmul.f32 %v409, %v690
        %v700 = vpack.c.bf16 %v693, %v692
        %v701 = vpack.c.bf16 %v695, %v694
        %v702 = vpack.c.bf16 %v697, %v696
        %v703 = vpack.c.bf16 %v699, %v698
        %v704 = vld [vmem:[%s3 + $0x10] sm:$0xf]
        %v705 = vld [vmem:[%s3 + $0x14] sm:$0xf]
        %v708 = vunpack.c.l.b16 %v704
        %v709 = vunpack.c.l.b16 %v705
        %v710 = vpack.c.b16 %v709, %v708
        %v713 = vsel %vm470, %v700, 0
        %v716 = vsel %vm470, %v701, 0
        %v719 = vsel %vm470, %v702, 0
        %v722 = vsel %vm470, %v703, 0
        %724 = vmatpush.bf16.msra.mxu0 0
        %725 = vmatpush.bf16.msra.mxu0 0
        %726 = vmatpush.bf16.msra.mxu0 0
        %727 = vmatpush.bf16.msra.mxu0 0
        %728 = vmatpush.bf16.msra.mxu0 0
        %729 = vmatpush.bf16.msra.mxu0 0
        %730 = vmatpush.bf16.msra.mxu0 0
        %731 = vmatpush.bf16.msra.mxu0 %v710
        %732 = vmatmul.bf16.gmra.mxu0 %v713
        %v733 = vpop.f32.mrf.mxu0
        %v734 = vadd.f32 0.0, %v733
        %v735 = vpop.f32.mrf.mxu0
        %v736 = vadd.f32 0.0, %v735
        %737 = vmatmul.bf16.gmra.mxu0 %v716
        %v738 = vpop.f32.mrf.mxu0
        %v739 = vadd.f32 0.0, %v738
        %v740 = vpop.f32.mrf.mxu0
        %v741 = vadd.f32 0.0, %v740
        %742 = vmatmul.bf16.gmra.mxu0 %v719
        %v743 = vpop.f32.mrf.mxu0
        %v744 = vadd.f32 0.0, %v743
        %v745 = vpop.f32.mrf.mxu0
        %v746 = vadd.f32 0.0, %v745
        %747 = vmatmul.bf16.gmra.mxu0 %v722
        %v748 = vpop.f32.mrf.mxu0
        %v749 = vadd.f32 0.0, %v748
        %v750 = vpop.f32.mrf.mxu0
        %v751 = vadd.f32 0.0, %v750
        %752 = vdwg.mxu0
        %v753 = vadd.f32 %v652, %v734
        %v754 = vadd.f32 %v653, %v736
        %v755 = vadd.f32 %v654, %v739
        %v756 = vadd.f32 %v655, %v741
        %v757 = vadd.f32 %v656, %v744
        %v758 = vadd.f32 %v657, %v746
        %v759 = vadd.f32 %v658, %v749
        %v760 = vadd.f32 %v659, %v751
        %761 = vset.pattern.permute.xlu0 3
        %762 = vperm.xlu0 %761, %v296
        %v763 = vpop.permute.xlu0 %762
        %765 = vset.pattern.permute.xlu0 3
        %766 = vperm.xlu0 %765, %v297
        %v767 = vpop.permute.xlu0 %766
        %769 = vset.pattern.permute.xlu0 3
        %770 = vperm.xlu0 %769, %v298
        %v771 = vpop.permute.xlu0 %770
        %773 = vset.pattern.permute.xlu0 3
        %774 = vperm.xlu0 %773, %v299
        %v775 = vpop.permute.xlu0 %774
        %777 = vset.pattern.permute.xlu0 3
        %778 = vperm.xlu0 %777, %v300
        %v779 = vpop.permute.xlu0 %778
        %781 = vset.pattern.permute.xlu0 3
        %782 = vperm.xlu0 %781, %v301
        %v783 = vpop.permute.xlu0 %782
        %785 = vset.pattern.permute.xlu0 3
        %786 = vperm.xlu0 %785, %v302
        %v787 = vpop.permute.xlu0 %786
        %789 = vset.pattern.permute.xlu0 3
        %790 = vperm.xlu0 %789, %v303
        %v791 = vpop.permute.xlu0 %790
        %v793 = vmul.f32 %v383, %v763
        %v794 = vmul.f32 %v376, %v767
        %v795 = vmul.f32 %v377, %v771
        %v796 = vmul.f32 %v378, %v775
        %v797 = vmul.f32 %v379, %v779
        %v798 = vmul.f32 %v380, %v783
        %v799 = vmul.f32 %v381, %v787
        %v800 = vmul.f32 %v382, %v791
        %v801 = vpack.c.bf16 %v794, %v793
        %v802 = vpack.c.bf16 %v796, %v795
        %v803 = vpack.c.bf16 %v798, %v797
        %v804 = vpack.c.bf16 %v800, %v799
        %v805 = vld [vmem:[%s3 + $0x18] sm:$0xf]
        %v806 = vld [vmem:[%s3 + $0x1c] sm:$0xf]
        %v809 = vunpack.c.l.b16 %v805
        %v810 = vunpack.c.l.b16 %v806
        %v811 = vpack.c.b16 %v810, %v809
        %v814 = vsel %vm470, %v801, 0
        %v817 = vsel %vm470, %v802, 0
        %v820 = vsel %vm470, %v803, 0
        %v823 = vsel %vm470, %v804, 0
        %825 = vmatpush.bf16.msra.mxu0 0
        %826 = vmatpush.bf16.msra.mxu0 0
        %827 = vmatpush.bf16.msra.mxu0 0
        %828 = vmatpush.bf16.msra.mxu0 0
        %829 = vmatpush.bf16.msra.mxu0 0
        %830 = vmatpush.bf16.msra.mxu0 0
        %831 = vmatpush.bf16.msra.mxu0 0
        %832 = vmatpush.bf16.msra.mxu0 %v811
        %833 = vmatmul.bf16.gmra.mxu0 %v814
        %v834 = vpop.f32.mrf.mxu0
        %v835 = vadd.f32 0.0, %v834
        %v836 = vpop.f32.mrf.mxu0
        %v837 = vadd.f32 0.0, %v836
        %838 = vmatmul.bf16.gmra.mxu0 %v817
        %v839 = vpop.f32.mrf.mxu0
        %v840 = vadd.f32 0.0, %v839
        %v841 = vpop.f32.mrf.mxu0
        %v842 = vadd.f32 0.0, %v841
        %843 = vmatmul.bf16.gmra.mxu0 %v820
        %v844 = vpop.f32.mrf.mxu0
        %v845 = vadd.f32 0.0, %v844
        %v846 = vpop.f32.mrf.mxu0
        %v847 = vadd.f32 0.0, %v846
        %848 = vmatmul.bf16.gmra.mxu0 %v823
        %v849 = vpop.f32.mrf.mxu0
        %v850 = vadd.f32 0.0, %v849
        %v851 = vpop.f32.mrf.mxu0
        %v852 = vadd.f32 0.0, %v851
        %853 = vdwg.mxu0
        %v854 = vadd.f32 %v753, %v835
        %v855 = vadd.f32 %v754, %v837
        %v856 = vadd.f32 %v755, %v840
        %v857 = vadd.f32 %v756, %v842
        %v858 = vadd.f32 %v757, %v845
        %v859 = vadd.f32 %v758, %v847
        %v860 = vadd.f32 %v759, %v850
        %v861 = vadd.f32 %v760, %v852
        %862 = vset.pattern.permute.xlu0 5
        %863 = vperm.xlu0 %862, %v296
        %v864 = vpop.permute.xlu0 %863
        %866 = vset.pattern.permute.xlu0 5
        %867 = vperm.xlu0 %866, %v297
        %v868 = vpop.permute.xlu0 %867
        %870 = vset.pattern.permute.xlu0 5
        %871 = vperm.xlu0 %870, %v298
        %v872 = vpop.permute.xlu0 %871
        %874 = vset.pattern.permute.xlu0 5
        %875 = vperm.xlu0 %874, %v299
        %v876 = vpop.permute.xlu0 %875
        %878 = vset.pattern.permute.xlu0 5
        %879 = vperm.xlu0 %878, %v300
        %v880 = vpop.permute.xlu0 %879
        %882 = vset.pattern.permute.xlu0 5
        %883 = vperm.xlu0 %882, %v301
        %v884 = vpop.permute.xlu0 %883
        %886 = vset.pattern.permute.xlu0 5
        %887 = vperm.xlu0 %886, %v302
        %v888 = vpop.permute.xlu0 %887
        %890 = vset.pattern.permute.xlu0 5
        %891 = vperm.xlu0 %890, %v303
        %v892 = vpop.permute.xlu0 %891
        %v894 = vmul.f32 %v377, %v864
        %v895 = vmul.f32 %v378, %v868
        %v896 = vmul.f32 %v379, %v872
        %v897 = vmul.f32 %v380, %v876
        %v898 = vmul.f32 %v381, %v880
        %v899 = vmul.f32 %v382, %v884
        %v900 = vmul.f32 %v383, %v888
        %v901 = vmul.f32 %v376, %v892
        %v902 = vpack.c.bf16 %v895, %v894
        %v903 = vpack.c.bf16 %v897, %v896
        %v904 = vpack.c.bf16 %v899, %v898
        %v905 = vpack.c.bf16 %v901, %v900
        %v906 = vld [vmem:[%s3 + $0x28] sm:$0xf]
        %v907 = vld [vmem:[%s3 + $0x2c] sm:$0xf]
        %v910 = vunpack.c.l.b16 %v906
        %v911 = vunpack.c.l.b16 %v907
        %v912 = vpack.c.b16 %v911, %v910
        %v915 = vsel %vm470, %v902, 0
        %v918 = vsel %vm470, %v903, 0
        %v921 = vsel %vm470, %v904, 0
        %v924 = vsel %vm470, %v905, 0
        %926 = vmatpush.bf16.msra.mxu0 0
        %927 = vmatpush.bf16.msra.mxu0 0
        %928 = vmatpush.bf16.msra.mxu0 0
        %929 = vmatpush.bf16.msra.mxu0 0
        %930 = vmatpush.bf16.msra.mxu0 0
        %931 = vmatpush.bf16.msra.mxu0 0
        %932 = vmatpush.bf16.msra.mxu0 0
        %933 = vmatpush.bf16.msra.mxu0 %v912
        %934 = vmatmul.bf16.gmra.mxu0 %v915
        %v935 = vpop.f32.mrf.mxu0
        %v936 = vadd.f32 0.0, %v935
        %v937 = vpop.f32.mrf.mxu0
        %v938 = vadd.f32 0.0, %v937
        %939 = vmatmul.bf16.gmra.mxu0 %v918
        %v940 = vpop.f32.mrf.mxu0
        %v941 = vadd.f32 0.0, %v940
        %v942 = vpop.f32.mrf.mxu0
        %v943 = vadd.f32 0.0, %v942
        %944 = vmatmul.bf16.gmra.mxu0 %v921
        %v945 = vpop.f32.mrf.mxu0
        %v946 = vadd.f32 0.0, %v945
        %v947 = vpop.f32.mrf.mxu0
        %v948 = vadd.f32 0.0, %v947
        %949 = vmatmul.bf16.gmra.mxu0 %v924
        %v950 = vpop.f32.mrf.mxu0
        %v951 = vadd.f32 0.0, %v950
        %v952 = vpop.f32.mrf.mxu0
        %v953 = vadd.f32 0.0, %v952
        %954 = vdwg.mxu0
        %v955 = vadd.f32 %v854, %v936
        %v956 = vadd.f32 %v855, %v938
        %v957 = vadd.f32 %v856, %v941
        %v958 = vadd.f32 %v857, %v943
        %v959 = vadd.f32 %v858, %v946
        %v960 = vadd.f32 %v859, %v948
        %v961 = vadd.f32 %v860, %v951
        %v962 = vadd.f32 %v861, %v953
        %v963 = vrot.slane %v376, 1
        %v964 = vrot.slane %v377, 1
        %v965 = vrot.slane %v378, 1
        %v966 = vrot.slane %v379, 1
        %v967 = vrot.slane %v380, 1
        %v968 = vrot.slane %v381, 1
        %v969 = vrot.slane %v382, 1
        %v970 = vrot.slane %v383, 1
        %vm971 = vcmp.lt.s32.totalorder %v400, 7
        %v972 = vsel %vm971, %v969, %v970
        %v973 = vsel %vm971, %v968, %v969
        %v974 = vsel %vm971, %v967, %v968
        %v975 = vsel %vm971, %v966, %v967
        %v976 = vsel %vm971, %v965, %v966
        %v977 = vsel %vm971, %v964, %v965
        %v978 = vsel %vm971, %v963, %v964
        %v979 = vsel %vm971, %v970, %v963
        %980 = vset.pattern.permute.xlu0 6
        %981 = vperm.xlu0 %980, %v296
        %v982 = vpop.permute.xlu0 %981
        %984 = vset.pattern.permute.xlu0 6
        %985 = vperm.xlu0 %984, %v297
        %v986 = vpop.permute.xlu0 %985
        %988 = vset.pattern.permute.xlu0 6
        %989 = vperm.xlu0 %988, %v298
        %v990 = vpop.permute.xlu0 %989
        %992 = vset.pattern.permute.xlu0 6
        %993 = vperm.xlu0 %992, %v299
        %v994 = vpop.permute.xlu0 %993
        %996 = vset.pattern.permute.xlu0 6
        %997 = vperm.xlu0 %996, %v300
        %v998 = vpop.permute.xlu0 %997
        %1000 = vset.pattern.permute.xlu0 6
        %1001 = vperm.xlu0 %1000, %v301
        %v1002 = vpop.permute.xlu0 %1001
        %1004 = vset.pattern.permute.xlu0 6
        %1005 = vperm.xlu0 %1004, %v302
        %v1006 = vpop.permute.xlu0 %1005
        %1008 = vset.pattern.permute.xlu0 6
        %1009 = vperm.xlu0 %1008, %v303
        %v1010 = vpop.permute.xlu0 %1009
        %v1012 = vmul.f32 %v979, %v982
        %v1013 = vmul.f32 %v978, %v986
        %v1014 = vmul.f32 %v977, %v990
        %v1015 = vmul.f32 %v976, %v994
        %v1016 = vmul.f32 %v975, %v998
        %v1017 = vmul.f32 %v974, %v1002
        %v1018 = vmul.f32 %v973, %v1006
        %v1019 = vmul.f32 %v972, %v1010
        %v1020 = vpack.c.bf16 %v1013, %v1012
        %v1021 = vpack.c.bf16 %v1015, %v1014
        %v1022 = vpack.c.bf16 %v1017, %v1016
        %v1023 = vpack.c.bf16 %v1019, %v1018
        %v1024 = vld [vmem:[%s3 + $0x30] sm:$0xf]
        %v1025 = vld [vmem:[%s3 + $0x34] sm:$0xf]
        %v1028 = vunpack.c.l.b16 %v1024
        %v1029 = vunpack.c.l.b16 %v1025
        %v1030 = vpack.c.b16 %v1029, %v1028
        %v1033 = vsel %vm470, %v1020, 0
        %v1036 = vsel %vm470, %v1021, 0
        %v1039 = vsel %vm470, %v1022, 0
        %v1042 = vsel %vm470, %v1023, 0
        %1044 = vmatpush.bf16.msra.mxu0 0
        %1045 = vmatpush.bf16.msra.mxu0 0
        %1046 = vmatpush.bf16.msra.mxu0 0
        %1047 = vmatpush.bf16.msra.mxu0 0
        %1048 = vmatpush.bf16.msra.mxu0 0
        %1049 = vmatpush.bf16.msra.mxu0 0
        %1050 = vmatpush.bf16.msra.mxu0 0
        %1051 = vmatpush.bf16.msra.mxu0 %v1030
        %1052 = vmatmul.bf16.gmra.mxu0 %v1033
        %v1053 = vpop.f32.mrf.mxu0
        %v1054 = vadd.f32 0.0, %v1053
        %v1055 = vpop.f32.mrf.mxu0
        %v1056 = vadd.f32 0.0, %v1055
        %1057 = vmatmul.bf16.gmra.mxu0 %v1036
        %v1058 = vpop.f32.mrf.mxu0
        %v1059 = vadd.f32 0.0, %v1058
        %v1060 = vpop.f32.mrf.mxu0
        %v1061 = vadd.f32 0.0, %v1060
        %1062 = vmatmul.bf16.gmra.mxu0 %v1039
        %v1063 = vpop.f32.mrf.mxu0
        %v1064 = vadd.f32 0.0, %v1063
        %v1065 = vpop.f32.mrf.mxu0
        %v1066 = vadd.f32 0.0, %v1065
        %1067 = vmatmul.bf16.gmra.mxu0 %v1042
        %v1068 = vpop.f32.mrf.mxu0
        %v1069 = vadd.f32 0.0, %v1068
        %v1070 = vpop.f32.mrf.mxu0
        %v1071 = vadd.f32 0.0, %v1070
        %1072 = vdwg.mxu0
        %v1073 = vadd.f32 %v955, %v1054
        %v1074 = vadd.f32 %v956, %v1056
        %v1075 = vadd.f32 %v957, %v1059
        %v1076 = vadd.f32 %v958, %v1061
        %v1077 = vadd.f32 %v959, %v1064
        %v1078 = vadd.f32 %v960, %v1066
        %v1079 = vadd.f32 %v961, %v1069
        %v1080 = vadd.f32 %v962, %v1071
        %1081 = vset.pattern.permute.xlu0 7
        %1082 = vperm.xlu0 %1081, %v296
        %v1083 = vpop.permute.xlu0 %1082
        %1085 = vset.pattern.permute.xlu0 7
        %1086 = vperm.xlu0 %1085, %v297
        %v1087 = vpop.permute.xlu0 %1086
        %1089 = vset.pattern.permute.xlu0 7
        %1090 = vperm.xlu0 %1089, %v298
        %v1091 = vpop.permute.xlu0 %1090
        %1093 = vset.pattern.permute.xlu0 7
        %1094 = vperm.xlu0 %1093, %v299
        %v1095 = vpop.permute.xlu0 %1094
        %1097 = vset.pattern.permute.xlu0 7
        %1098 = vperm.xlu0 %1097, %v300
        %v1099 = vpop.permute.xlu0 %1098
        %1101 = vset.pattern.permute.xlu0 7
        %1102 = vperm.xlu0 %1101, %v301
        %v1103 = vpop.permute.xlu0 %1102
        %1105 = vset.pattern.permute.xlu0 7
        %1106 = vperm.xlu0 %1105, %v302
        %v1107 = vpop.permute.xlu0 %1106
        %1109 = vset.pattern.permute.xlu0 7
        %1110 = vperm.xlu0 %1109, %v303
        %v1111 = vpop.permute.xlu0 %1110
        %v1113 = vmul.f32 %v978, %v1083
        %v1114 = vmul.f32 %v977, %v1087
        %v1115 = vmul.f32 %v976, %v1091
        %v1116 = vmul.f32 %v975, %v1095
        %v1117 = vmul.f32 %v974, %v1099
        %v1118 = vmul.f32 %v973, %v1103
        %v1119 = vmul.f32 %v972, %v1107
        %v1120 = vmul.f32 %v979, %v1111
        %v1121 = vpack.c.bf16 %v1114, %v1113
        %v1122 = vpack.c.bf16 %v1116, %v1115
        %v1123 = vpack.c.bf16 %v1118, %v1117
        %v1124 = vpack.c.bf16 %v1120, %v1119
        %v1125 = vld [vmem:[%s3 + $0x38] sm:$0xf]
        %v1126 = vld [vmem:[%s3 + $0x3c] sm:$0xf]
        %v1129 = vunpack.c.l.b16 %v1125
        %v1130 = vunpack.c.l.b16 %v1126
        %v1131 = vpack.c.b16 %v1130, %v1129
        %v1134 = vsel %vm470, %v1121, 0
        %v1137 = vsel %vm470, %v1122, 0
        %v1140 = vsel %vm470, %v1123, 0
        %v1143 = vsel %vm470, %v1124, 0
        %1145 = vmatpush.bf16.msra.mxu0 0
        %1146 = vmatpush.bf16.msra.mxu0 0
        %1147 = vmatpush.bf16.msra.mxu0 0
        %1148 = vmatpush.bf16.msra.mxu0 0
        %1149 = vmatpush.bf16.msra.mxu0 0
        %1150 = vmatpush.bf16.msra.mxu0 0
        %1151 = vmatpush.bf16.msra.mxu0 0
        %1152 = vmatpush.bf16.msra.mxu0 %v1131
        %1153 = vmatmul.bf16.gmra.mxu0 %v1134
        %v1154 = vpop.f32.mrf.mxu0
        %v1155 = vadd.f32 0.0, %v1154
        %v1156 = vpop.f32.mrf.mxu0
        %v1157 = vadd.f32 0.0, %v1156
        %1158 = vmatmul.bf16.gmra.mxu0 %v1137
        %v1159 = vpop.f32.mrf.mxu0
        %v1160 = vadd.f32 0.0, %v1159
        %v1161 = vpop.f32.mrf.mxu0
        %v1162 = vadd.f32 0.0, %v1161
        %1163 = vmatmul.bf16.gmra.mxu0 %v1140
        %v1164 = vpop.f32.mrf.mxu0
        %v1165 = vadd.f32 0.0, %v1164
        %v1166 = vpop.f32.mrf.mxu0
        %v1167 = vadd.f32 0.0, %v1166
        %1168 = vmatmul.bf16.gmra.mxu0 %v1143
        %v1169 = vpop.f32.mrf.mxu0
        %v1170 = vadd.f32 0.0, %v1169
        %v1171 = vpop.f32.mrf.mxu0
        %v1172 = vadd.f32 0.0, %v1171
        %1173 = vdwg.mxu0
        %v1174 = vadd.f32 %v1073, %v1155
        %v1175 = vadd.f32 %v1074, %v1157
        %v1176 = vadd.f32 %v1075, %v1160
        %v1177 = vadd.f32 %v1076, %v1162
        %v1178 = vadd.f32 %v1077, %v1165
        %v1179 = vadd.f32 %v1078, %v1167
        %v1180 = vadd.f32 %v1079, %v1170
        %v1181 = vadd.f32 %v1080, %v1172
        %1182 = vset.pattern.permute.xlu0 8
        %1183 = vperm.xlu0 %1182, %v296
        %v1184 = vpop.permute.xlu0 %1183
        %1186 = vset.pattern.permute.xlu0 8
        %1187 = vperm.xlu0 %1186, %v297
        %v1188 = vpop.permute.xlu0 %1187
        %1190 = vset.pattern.permute.xlu0 8
        %1191 = vperm.xlu0 %1190, %v298
        %v1192 = vpop.permute.xlu0 %1191
        %1194 = vset.pattern.permute.xlu0 8
        %1195 = vperm.xlu0 %1194, %v299
        %v1196 = vpop.permute.xlu0 %1195
        %1198 = vset.pattern.permute.xlu0 8
        %1199 = vperm.xlu0 %1198, %v300
        %v1200 = vpop.permute.xlu0 %1199
        %1202 = vset.pattern.permute.xlu0 8
        %1203 = vperm.xlu0 %1202, %v301
        %v1204 = vpop.permute.xlu0 %1203
        %1206 = vset.pattern.permute.xlu0 8
        %1207 = vperm.xlu0 %1206, %v302
        %v1208 = vpop.permute.xlu0 %1207
        %1210 = vset.pattern.permute.xlu0 8
        %1211 = vperm.xlu0 %1210, %v303
        %v1212 = vpop.permute.xlu0 %1211
        %v1214 = vmul.f32 %v977, %v1184
        %v1215 = vmul.f32 %v976, %v1188
        %v1216 = vmul.f32 %v975, %v1192
        %v1217 = vmul.f32 %v974, %v1196
        %v1218 = vmul.f32 %v973, %v1200
        %v1219 = vmul.f32 %v972, %v1204
        %v1220 = vmul.f32 %v979, %v1208
        %v1221 = vmul.f32 %v978, %v1212
        %v1222 = vpack.c.bf16 %v1215, %v1214
        %v1223 = vpack.c.bf16 %v1217, %v1216
        %v1224 = vpack.c.bf16 %v1219, %v1218
        %v1225 = vpack.c.bf16 %v1221, %v1220
        %v1226 = vld [vmem:[%s3 + $0x40] sm:$0xf]
        %v1227 = vld [vmem:[%s3 + $0x44] sm:$0xf]
        %v1230 = vunpack.c.l.b16 %v1226
        %v1231 = vunpack.c.l.b16 %v1227
        %v1232 = vpack.c.b16 %v1231, %v1230
        %v1235 = vsel %vm470, %v1222, 0
        %v1238 = vsel %vm470, %v1223, 0
        %v1241 = vsel %vm470, %v1224, 0
        %v1244 = vsel %vm470, %v1225, 0
        %1246 = vmatpush.bf16.msra.mxu0 0
        %1247 = vmatpush.bf16.msra.mxu0 0
        %1248 = vmatpush.bf16.msra.mxu0 0
        %1249 = vmatpush.bf16.msra.mxu0 0
        %1250 = vmatpush.bf16.msra.mxu0 0
        %1251 = vmatpush.bf16.msra.mxu0 0
        %1252 = vmatpush.bf16.msra.mxu0 0
        %1253 = vmatpush.bf16.msra.mxu0 %v1232
        %1254 = vmatmul.bf16.gmra.mxu0 %v1235
        %v1255 = vpop.f32.mrf.mxu0
        %v1256 = vadd.f32 0.0, %v1255
        %v1257 = vpop.f32.mrf.mxu0
        %v1258 = vadd.f32 0.0, %v1257
        %1259 = vmatmul.bf16.gmra.mxu0 %v1238
        %v1260 = vpop.f32.mrf.mxu0
        %v1261 = vadd.f32 0.0, %v1260
        %v1262 = vpop.f32.mrf.mxu0
        %v1263 = vadd.f32 0.0, %v1262
        %1264 = vmatmul.bf16.gmra.mxu0 %v1241
        %v1265 = vpop.f32.mrf.mxu0
        %v1266 = vadd.f32 0.0, %v1265
        %v1267 = vpop.f32.mrf.mxu0
        %v1268 = vadd.f32 0.0, %v1267
        %1269 = vmatmul.bf16.gmra.mxu0 %v1244
        %v1270 = vpop.f32.mrf.mxu0
        %v1271 = vadd.f32 0.0, %v1270
        %v1272 = vpop.f32.mrf.mxu0
        %v1273 = vadd.f32 0.0, %v1272
        %1274 = vdwg.mxu0
        %v1275 = vadd.f32 %v1174, %v1256
        %v1276 = vadd.f32 %v1175, %v1258
        %v1277 = vadd.f32 %v1176, %v1261
        %v1278 = vadd.f32 %v1177, %v1263
        %v1279 = vadd.f32 %v1178, %v1266
        %v1280 = vadd.f32 %v1179, %v1268
        %v1281 = vadd.f32 %v1180, %v1271
        %v1282 = vadd.f32 %v1181, %v1273
        %v1283 = vperm.slane %v384, 0
        %v1284 = vadd.f32 %v1275, %v1283
        %v1285 = vadd.f32 %v1276, %v1283
        %v1286 = vadd.f32 %v1277, %v1283
        %v1287 = vadd.f32 %v1278, %v1283
        %v1288 = vadd.f32 %v1279, %v1283
        %v1289 = vadd.f32 %v1280, %v1283
        %v1290 = vadd.f32 %v1281, %v1283
        %v1291 = vadd.f32 %v1282, %v1283
        %v1292 = vmax.f32 %v1284, 0.0
        %v1293 = vmax.f32 %v1285, 0.0
        %v1294 = vmax.f32 %v1286, 0.0
        %v1295 = vmax.f32 %v1287, 0.0
        %v1296 = vmax.f32 %v1288, 0.0
        %v1297 = vmax.f32 %v1289, 0.0
        %v1298 = vmax.f32 %v1290, 0.0
        %v1299 = vmax.f32 %v1291, 0.0
        %v1300 = vld [vmem:[%s6 + $0x2] sm:$0x1]
        %v1301 = vpack.c.bf16 %v1293, %v1292
        %v1302 = vpack.c.bf16 %v1295, %v1294
        %v1303 = vpack.c.bf16 %v1297, %v1296
        %v1304 = vpack.c.bf16 %v1299, %v1298
        %v1305 = vld [vmem:[%s4 + $0x20] sm:$0xf]
        %v1306 = vld [vmem:[%s4 + $0x24] sm:$0xf]
        %v1307 = vrot.slane %v1292, 7
        %v1308 = vrot.slane %v1293, 7
        %v1309 = vrot.slane %v1294, 7
        %v1310 = vrot.slane %v1295, 7
        %v1311 = vrot.slane %v1296, 7
        %v1312 = vrot.slane %v1297, 7
        %v1313 = vrot.slane %v1298, 7
        %v1314 = vrot.slane %v1299, 7
        %v1315 = vsel %vm401, %v1313, %v1314
        %v1316 = vsel %vm401, %v1312, %v1313
        %v1317 = vsel %vm401, %v1311, %v1312
        %v1318 = vsel %vm401, %v1310, %v1311
        %v1319 = vsel %vm401, %v1309, %v1310
        %v1320 = vsel %vm401, %v1308, %v1309
        %v1321 = vsel %vm401, %v1307, %v1308
        %v1322 = vsel %vm401, %v1314, %v1307
        %v1323 = vmul.f32 %v1315, %v413
        %v1324 = vmul.f32 %v1322, %v418
        %v1325 = vmul.f32 %v1321, %v423
        %v1326 = vmul.f32 %v1320, %v428
        %v1327 = vmul.f32 %v1319, %v433
        %v1328 = vmul.f32 %v1318, %v438
        %v1329 = vmul.f32 %v1317, %v443
        %v1330 = vmul.f32 %v1316, %v448
        %v1331 = vpack.c.bf16 %v1324, %v1323
        %v1332 = vpack.c.bf16 %v1326, %v1325
        %v1333 = vpack.c.bf16 %v1328, %v1327
        %v1334 = vpack.c.bf16 %v1330, %v1329
        %v1335 = vld [vmem:[%s4] sm:$0xf]
        %v1336 = vld [vmem:[%s4 + $0x4] sm:$0xf]
        %v1339 = vunpack.c.l.b16 %v1335
        %v1340 = vunpack.c.l.b16 %v1336
        %v1341 = vpack.c.b16 %v1340, %v1339
        %v1344 = vsel %vm470, %v1331, 0
        %v1347 = vsel %vm470, %v1332, 0
        %v1350 = vsel %vm470, %v1333, 0
        %v1353 = vsel %vm470, %v1334, 0
        %1355 = vmatpush.bf16.msra.mxu0 0
        %1356 = vmatpush.bf16.msra.mxu0 0
        %1357 = vmatpush.bf16.msra.mxu0 0
        %1358 = vmatpush.bf16.msra.mxu0 0
        %1359 = vmatpush.bf16.msra.mxu0 0
        %1360 = vmatpush.bf16.msra.mxu0 0
        %1361 = vmatpush.bf16.msra.mxu0 0
        %1362 = vmatpush.bf16.msra.mxu0 %v1341
        %1363 = vmatmul.bf16.gmra.mxu0 %v1344
        %v1364 = vpop.f32.mrf.mxu0
        %v1365 = vadd.f32 0.0, %v1364
        %v1366 = vpop.f32.mrf.mxu0
        %v1367 = vadd.f32 0.0, %v1366
        %1368 = vmatmul.bf16.gmra.mxu0 %v1347
        %v1369 = vpop.f32.mrf.mxu0
        %v1370 = vadd.f32 0.0, %v1369
        %v1371 = vpop.f32.mrf.mxu0
        %v1372 = vadd.f32 0.0, %v1371
        %1373 = vmatmul.bf16.gmra.mxu0 %v1350
        %v1374 = vpop.f32.mrf.mxu0
        %v1375 = vadd.f32 0.0, %v1374
        %v1376 = vpop.f32.mrf.mxu0
        %v1377 = vadd.f32 0.0, %v1376
        %1378 = vmatmul.bf16.gmra.mxu0 %v1353
        %v1379 = vpop.f32.mrf.mxu0
        %v1380 = vadd.f32 0.0, %v1379
        %v1381 = vpop.f32.mrf.mxu0
        %v1382 = vadd.f32 0.0, %v1381
        %1383 = vdwg.mxu0
        %v1386 = vunpack.c.l.b16 %v1305
        %v1387 = vunpack.c.l.b16 %v1306
        %v1388 = vpack.c.b16 %v1387, %v1386
        %v1391 = vsel %vm470, %v1301, 0
        %v1394 = vsel %vm470, %v1302, 0
        %v1397 = vsel %vm470, %v1303, 0
        %v1400 = vsel %vm470, %v1304, 0
        %1402 = vmatpush.bf16.msra.mxu0 0
        %1403 = vmatpush.bf16.msra.mxu0 0
        %1404 = vmatpush.bf16.msra.mxu0 0
        %1405 = vmatpush.bf16.msra.mxu0 0
        %1406 = vmatpush.bf16.msra.mxu0 0
        %1407 = vmatpush.bf16.msra.mxu0 0
        %1408 = vmatpush.bf16.msra.mxu0 0
        %1409 = vmatpush.bf16.msra.mxu0 %v1388
        %1410 = vmatmul.bf16.gmra.mxu0 %v1391
        %v1411 = vpop.f32.mrf.mxu0
        %v1412 = vadd.f32 %v1365, %v1411
        %v1413 = vpop.f32.mrf.mxu0
        %v1414 = vadd.f32 %v1367, %v1413
        %1415 = vmatmul.bf16.gmra.mxu0 %v1394
        %v1416 = vpop.f32.mrf.mxu0
        %v1417 = vadd.f32 %v1370, %v1416
        %v1418 = vpop.f32.mrf.mxu0
        %v1419 = vadd.f32 %v1372, %v1418
        %1420 = vmatmul.bf16.gmra.mxu0 %v1397
        %v1421 = vpop.f32.mrf.mxu0
        %v1422 = vadd.f32 %v1375, %v1421
        %v1423 = vpop.f32.mrf.mxu0
        %v1424 = vadd.f32 %v1377, %v1423
        %1425 = vmatmul.bf16.gmra.mxu0 %v1400
        %v1426 = vpop.f32.mrf.mxu0
        %v1427 = vadd.f32 %v1380, %v1426
        %v1428 = vpop.f32.mrf.mxu0
        %v1429 = vadd.f32 %v1382, %v1428
        %1430 = vdwg.mxu0
        %v1431 = vmul.f32 %v1322, %v561
        %v1432 = vmul.f32 %v1321, %v565
        %v1433 = vmul.f32 %v1320, %v569
        %v1434 = vmul.f32 %v1319, %v573
        %v1435 = vmul.f32 %v1318, %v577
        %v1436 = vmul.f32 %v1317, %v581
        %v1437 = vmul.f32 %v1316, %v585
        %v1438 = vmul.f32 %v1315, %v589
        %v1439 = vpack.c.bf16 %v1432, %v1431
        %v1440 = vpack.c.bf16 %v1434, %v1433
        %v1441 = vpack.c.bf16 %v1436, %v1435
        %v1442 = vpack.c.bf16 %v1438, %v1437
        %v1443 = vld [vmem:[%s4 + $0x8] sm:$0xf]
        %v1444 = vld [vmem:[%s4 + $0xc] sm:$0xf]
        %v1447 = vunpack.c.l.b16 %v1443
        %v1448 = vunpack.c.l.b16 %v1444
        %v1449 = vpack.c.b16 %v1448, %v1447
        %v1452 = vsel %vm470, %v1439, 0
        %v1455 = vsel %vm470, %v1440, 0
        %v1458 = vsel %vm470, %v1441, 0
        %v1461 = vsel %vm470, %v1442, 0
        %1463 = vmatpush.bf16.msra.mxu0 0
        %1464 = vmatpush.bf16.msra.mxu0 0
        %1465 = vmatpush.bf16.msra.mxu0 0
        %1466 = vmatpush.bf16.msra.mxu0 0
        %1467 = vmatpush.bf16.msra.mxu0 0
        %1468 = vmatpush.bf16.msra.mxu0 0
        %1469 = vmatpush.bf16.msra.mxu0 0
        %1470 = vmatpush.bf16.msra.mxu0 %v1449
        %1471 = vmatmul.bf16.gmra.mxu0 %v1452
        %v1472 = vpop.f32.mrf.mxu0
        %v1473 = vadd.f32 0.0, %v1472
        %v1474 = vpop.f32.mrf.mxu0
        %v1475 = vadd.f32 0.0, %v1474
        %1476 = vmatmul.bf16.gmra.mxu0 %v1455
        %v1477 = vpop.f32.mrf.mxu0
        %v1478 = vadd.f32 0.0, %v1477
        %v1479 = vpop.f32.mrf.mxu0
        %v1480 = vadd.f32 0.0, %v1479
        %1481 = vmatmul.bf16.gmra.mxu0 %v1458
        %v1482 = vpop.f32.mrf.mxu0
        %v1483 = vadd.f32 0.0, %v1482
        %v1484 = vpop.f32.mrf.mxu0
        %v1485 = vadd.f32 0.0, %v1484
        %1486 = vmatmul.bf16.gmra.mxu0 %v1461
        %v1487 = vpop.f32.mrf.mxu0
        %v1488 = vadd.f32 0.0, %v1487
        %v1489 = vpop.f32.mrf.mxu0
        %v1490 = vadd.f32 0.0, %v1489
        %1491 = vdwg.mxu0
        %v1492 = vadd.f32 %v1412, %v1473
        %v1493 = vadd.f32 %v1414, %v1475
        %v1494 = vadd.f32 %v1417, %v1478
        %v1495 = vadd.f32 %v1419, %v1480
        %v1496 = vadd.f32 %v1422, %v1483
        %v1497 = vadd.f32 %v1424, %v1485
        %v1498 = vadd.f32 %v1427, %v1488
        %v1499 = vadd.f32 %v1429, %v1490
        %v1500 = vmul.f32 %v1321, %v662
        %v1501 = vmul.f32 %v1320, %v666
        %v1502 = vmul.f32 %v1319, %v670
        %v1503 = vmul.f32 %v1318, %v674
        %v1504 = vmul.f32 %v1317, %v678
        %v1505 = vmul.f32 %v1316, %v682
        %v1506 = vmul.f32 %v1315, %v686
        %v1507 = vmul.f32 %v1322, %v690
        %v1508 = vpack.c.bf16 %v1501, %v1500
        %v1509 = vpack.c.bf16 %v1503, %v1502
        %v1510 = vpack.c.bf16 %v1505, %v1504
        %v1511 = vpack.c.bf16 %v1507, %v1506
        %v1512 = vld [vmem:[%s4 + $0x10] sm:$0xf]
        %v1513 = vld [vmem:[%s4 + $0x14] sm:$0xf]
        %v1516 = vunpack.c.l.b16 %v1512
        %v1517 = vunpack.c.l.b16 %v1513
        %v1518 = vpack.c.b16 %v1517, %v1516
        %v1521 = vsel %vm470, %v1508, 0
        %v1524 = vsel %vm470, %v1509, 0
        %v1527 = vsel %vm470, %v1510, 0
        %v1530 = vsel %vm470, %v1511, 0
        %1532 = vmatpush.bf16.msra.mxu0 0
        %1533 = vmatpush.bf16.msra.mxu0 0
        %1534 = vmatpush.bf16.msra.mxu0 0
        %1535 = vmatpush.bf16.msra.mxu0 0
        %1536 = vmatpush.bf16.msra.mxu0 0
        %1537 = vmatpush.bf16.msra.mxu0 0
        %1538 = vmatpush.bf16.msra.mxu0 0
        %1539 = vmatpush.bf16.msra.mxu0 %v1518
        %1540 = vmatmul.bf16.gmra.mxu0 %v1521
        %v1541 = vpop.f32.mrf.mxu0
        %v1542 = vadd.f32 0.0, %v1541
        %v1543 = vpop.f32.mrf.mxu0
        %v1544 = vadd.f32 0.0, %v1543
        %1545 = vmatmul.bf16.gmra.mxu0 %v1524
        %v1546 = vpop.f32.mrf.mxu0
        %v1547 = vadd.f32 0.0, %v1546
        %v1548 = vpop.f32.mrf.mxu0
        %v1549 = vadd.f32 0.0, %v1548
        %1550 = vmatmul.bf16.gmra.mxu0 %v1527
        %v1551 = vpop.f32.mrf.mxu0
        %v1552 = vadd.f32 0.0, %v1551
        %v1553 = vpop.f32.mrf.mxu0
        %v1554 = vadd.f32 0.0, %v1553
        %1555 = vmatmul.bf16.gmra.mxu0 %v1530
        %v1556 = vpop.f32.mrf.mxu0
        %v1557 = vadd.f32 0.0, %v1556
        %v1558 = vpop.f32.mrf.mxu0
        %v1559 = vadd.f32 0.0, %v1558
        %1560 = vdwg.mxu0
        %v1561 = vadd.f32 %v1492, %v1542
        %v1562 = vadd.f32 %v1493, %v1544
        %v1563 = vadd.f32 %v1494, %v1547
        %v1564 = vadd.f32 %v1495, %v1549
        %v1565 = vadd.f32 %v1496, %v1552
        %v1566 = vadd.f32 %v1497, %v1554
        %v1567 = vadd.f32 %v1498, %v1557
        %v1568 = vadd.f32 %v1499, %v1559
        %v1569 = vmul.f32 %v1299, %v763
        %v1570 = vmul.f32 %v1292, %v767
        %v1571 = vmul.f32 %v1293, %v771
        %v1572 = vmul.f32 %v1294, %v775
        %v1573 = vmul.f32 %v1295, %v779
        %v1574 = vmul.f32 %v1296, %v783
        %v1575 = vmul.f32 %v1297, %v787
        %v1576 = vmul.f32 %v1298, %v791
        %v1577 = vpack.c.bf16 %v1570, %v1569
        %v1578 = vpack.c.bf16 %v1572, %v1571
        %v1579 = vpack.c.bf16 %v1574, %v1573
        %v1580 = vpack.c.bf16 %v1576, %v1575
        %v1581 = vld [vmem:[%s4 + $0x18] sm:$0xf]
        %v1582 = vld [vmem:[%s4 + $0x1c] sm:$0xf]
        %v1585 = vunpack.c.l.b16 %v1581
        %v1586 = vunpack.c.l.b16 %v1582
        %v1587 = vpack.c.b16 %v1586, %v1585
        %v1590 = vsel %vm470, %v1577, 0
        %v1593 = vsel %vm470, %v1578, 0
        %v1596 = vsel %vm470, %v1579, 0
        %v1599 = vsel %vm470, %v1580, 0
        %1601 = vmatpush.bf16.msra.mxu0 0
        %1602 = vmatpush.bf16.msra.mxu0 0
        %1603 = vmatpush.bf16.msra.mxu0 0
        %1604 = vmatpush.bf16.msra.mxu0 0
        %1605 = vmatpush.bf16.msra.mxu0 0
        %1606 = vmatpush.bf16.msra.mxu0 0
        %1607 = vmatpush.bf16.msra.mxu0 0
        %1608 = vmatpush.bf16.msra.mxu0 %v1587
        %1609 = vmatmul.bf16.gmra.mxu0 %v1590
        %v1610 = vpop.f32.mrf.mxu0
        %v1611 = vadd.f32 0.0, %v1610
        %v1612 = vpop.f32.mrf.mxu0
        %v1613 = vadd.f32 0.0, %v1612
        %1614 = vmatmul.bf16.gmra.mxu0 %v1593
        %v1615 = vpop.f32.mrf.mxu0
        %v1616 = vadd.f32 0.0, %v1615
        %v1617 = vpop.f32.mrf.mxu0
        %v1618 = vadd.f32 0.0, %v1617
        %1619 = vmatmul.bf16.gmra.mxu0 %v1596
        %v1620 = vpop.f32.mrf.mxu0
        %v1621 = vadd.f32 0.0, %v1620
        %v1622 = vpop.f32.mrf.mxu0
        %v1623 = vadd.f32 0.0, %v1622
        %1624 = vmatmul.bf16.gmra.mxu0 %v1599
        %v1625 = vpop.f32.mrf.mxu0
        %v1626 = vadd.f32 0.0, %v1625
        %v1627 = vpop.f32.mrf.mxu0
        %v1628 = vadd.f32 0.0, %v1627
        %1629 = vdwg.mxu0
        %v1630 = vadd.f32 %v1561, %v1611
        %v1631 = vadd.f32 %v1562, %v1613
        %v1632 = vadd.f32 %v1563, %v1616
        %v1633 = vadd.f32 %v1564, %v1618
        %v1634 = vadd.f32 %v1565, %v1621
        %v1635 = vadd.f32 %v1566, %v1623
        %v1636 = vadd.f32 %v1567, %v1626
        %v1637 = vadd.f32 %v1568, %v1628
        %v1638 = vmul.f32 %v1293, %v864
        %v1639 = vmul.f32 %v1294, %v868
        %v1640 = vmul.f32 %v1295, %v872
        %v1641 = vmul.f32 %v1296, %v876
        %v1642 = vmul.f32 %v1297, %v880
        %v1643 = vmul.f32 %v1298, %v884
        %v1644 = vmul.f32 %v1299, %v888
        %v1645 = vmul.f32 %v1292, %v892
        %v1646 = vpack.c.bf16 %v1639, %v1638
        %v1647 = vpack.c.bf16 %v1641, %v1640
        %v1648 = vpack.c.bf16 %v1643, %v1642
        %v1649 = vpack.c.bf16 %v1645, %v1644
        %v1650 = vld [vmem:[%s4 + $0x28] sm:$0xf]
        %v1651 = vld [vmem:[%s4 + $0x2c] sm:$0xf]
        %v1654 = vunpack.c.l.b16 %v1650
        %v1655 = vunpack.c.l.b16 %v1651
        %v1656 = vpack.c.b16 %v1655, %v1654
        %v1659 = vsel %vm470, %v1646, 0
        %v1662 = vsel %vm470, %v1647, 0
        %v1665 = vsel %vm470, %v1648, 0
        %v1668 = vsel %vm470, %v1649, 0
        %1670 = vmatpush.bf16.msra.mxu0 0
        %1671 = vmatpush.bf16.msra.mxu0 0
        %1672 = vmatpush.bf16.msra.mxu0 0
        %1673 = vmatpush.bf16.msra.mxu0 0
        %1674 = vmatpush.bf16.msra.mxu0 0
        %1675 = vmatpush.bf16.msra.mxu0 0
        %1676 = vmatpush.bf16.msra.mxu0 0
        %1677 = vmatpush.bf16.msra.mxu0 %v1656
        %1678 = vmatmul.bf16.gmra.mxu0 %v1659
        %v1679 = vpop.f32.mrf.mxu0
        %v1680 = vadd.f32 0.0, %v1679
        %v1681 = vpop.f32.mrf.mxu0
        %v1682 = vadd.f32 0.0, %v1681
        %1683 = vmatmul.bf16.gmra.mxu0 %v1662
        %v1684 = vpop.f32.mrf.mxu0
        %v1685 = vadd.f32 0.0, %v1684
        %v1686 = vpop.f32.mrf.mxu0
        %v1687 = vadd.f32 0.0, %v1686
        %1688 = vmatmul.bf16.gmra.mxu0 %v1665
        %v1689 = vpop.f32.mrf.mxu0
        %v1690 = vadd.f32 0.0, %v1689
        %v1691 = vpop.f32.mrf.mxu0
        %v1692 = vadd.f32 0.0, %v1691
        %1693 = vmatmul.bf16.gmra.mxu0 %v1668
        %v1694 = vpop.f32.mrf.mxu0
        %v1695 = vadd.f32 0.0, %v1694
        %v1696 = vpop.f32.mrf.mxu0
        %v1697 = vadd.f32 0.0, %v1696
        %1698 = vdwg.mxu0
        %v1699 = vadd.f32 %v1630, %v1680
        %v1700 = vadd.f32 %v1631, %v1682
        %v1701 = vadd.f32 %v1632, %v1685
        %v1702 = vadd.f32 %v1633, %v1687
        %v1703 = vadd.f32 %v1634, %v1690
        %v1704 = vadd.f32 %v1635, %v1692
        %v1705 = vadd.f32 %v1636, %v1695
        %v1706 = vadd.f32 %v1637, %v1697
        %v1707 = vrot.slane %v1292, 1
        %v1708 = vrot.slane %v1293, 1
        %v1709 = vrot.slane %v1294, 1
        %v1710 = vrot.slane %v1295, 1
        %v1711 = vrot.slane %v1296, 1
        %v1712 = vrot.slane %v1297, 1
        %v1713 = vrot.slane %v1298, 1
        %v1714 = vrot.slane %v1299, 1
        %v1715 = vsel %vm971, %v1713, %v1714
        %v1716 = vsel %vm971, %v1712, %v1713
        %v1717 = vsel %vm971, %v1711, %v1712
        %v1718 = vsel %vm971, %v1710, %v1711
        %v1719 = vsel %vm971, %v1709, %v1710
        %v1720 = vsel %vm971, %v1708, %v1709
        %v1721 = vsel %vm971, %v1707, %v1708
        %v1722 = vsel %vm971, %v1714, %v1707
        %v1723 = vmul.f32 %v1722, %v982
        %v1724 = vmul.f32 %v1721, %v986
        %v1725 = vmul.f32 %v1720, %v990
        %v1726 = vmul.f32 %v1719, %v994
        %v1727 = vmul.f32 %v1718, %v998
        %v1728 = vmul.f32 %v1717, %v1002
        %v1729 = vmul.f32 %v1716, %v1006
        %v1730 = vmul.f32 %v1715, %v1010
        %v1731 = vpack.c.bf16 %v1724, %v1723
        %v1732 = vpack.c.bf16 %v1726, %v1725
        %v1733 = vpack.c.bf16 %v1728, %v1727
        %v1734 = vpack.c.bf16 %v1730, %v1729
        %v1735 = vld [vmem:[%s4 + $0x30] sm:$0xf]
        %v1736 = vld [vmem:[%s4 + $0x34] sm:$0xf]
        %v1739 = vunpack.c.l.b16 %v1735
        %v1740 = vunpack.c.l.b16 %v1736
        %v1741 = vpack.c.b16 %v1740, %v1739
        %v1744 = vsel %vm470, %v1731, 0
        %v1747 = vsel %vm470, %v1732, 0
        %v1750 = vsel %vm470, %v1733, 0
        %v1753 = vsel %vm470, %v1734, 0
        %1755 = vmatpush.bf16.msra.mxu0 0
        %1756 = vmatpush.bf16.msra.mxu0 0
        %1757 = vmatpush.bf16.msra.mxu0 0
        %1758 = vmatpush.bf16.msra.mxu0 0
        %1759 = vmatpush.bf16.msra.mxu0 0
        %1760 = vmatpush.bf16.msra.mxu0 0
        %1761 = vmatpush.bf16.msra.mxu0 0
        %1762 = vmatpush.bf16.msra.mxu0 %v1741
        %1763 = vmatmul.bf16.gmra.mxu0 %v1744
        %v1764 = vpop.f32.mrf.mxu0
        %v1765 = vadd.f32 0.0, %v1764
        %v1766 = vpop.f32.mrf.mxu0
        %v1767 = vadd.f32 0.0, %v1766
        %1768 = vmatmul.bf16.gmra.mxu0 %v1747
        %v1769 = vpop.f32.mrf.mxu0
        %v1770 = vadd.f32 0.0, %v1769
        %v1771 = vpop.f32.mrf.mxu0
        %v1772 = vadd.f32 0.0, %v1771
        %1773 = vmatmul.bf16.gmra.mxu0 %v1750
        %v1774 = vpop.f32.mrf.mxu0
        %v1775 = vadd.f32 0.0, %v1774
        %v1776 = vpop.f32.mrf.mxu0
        %v1777 = vadd.f32 0.0, %v1776
        %1778 = vmatmul.bf16.gmra.mxu0 %v1753
        %v1779 = vpop.f32.mrf.mxu0
        %v1780 = vadd.f32 0.0, %v1779
        %v1781 = vpop.f32.mrf.mxu0
        %v1782 = vadd.f32 0.0, %v1781
        %1783 = vdwg.mxu0
        %v1784 = vadd.f32 %v1699, %v1765
        %v1785 = vadd.f32 %v1700, %v1767
        %v1786 = vadd.f32 %v1701, %v1770
        %v1787 = vadd.f32 %v1702, %v1772
        %v1788 = vadd.f32 %v1703, %v1775
        %v1789 = vadd.f32 %v1704, %v1777
        %v1790 = vadd.f32 %v1705, %v1780
        %v1791 = vadd.f32 %v1706, %v1782
        %v1792 = vmul.f32 %v1721, %v1083
        %v1793 = vmul.f32 %v1720, %v1087
        %v1794 = vmul.f32 %v1719, %v1091
        %v1795 = vmul.f32 %v1718, %v1095
        %v1796 = vmul.f32 %v1717, %v1099
        %v1797 = vmul.f32 %v1716, %v1103
        %v1798 = vmul.f32 %v1715, %v1107
        %v1799 = vmul.f32 %v1722, %v1111
        %v1800 = vpack.c.bf16 %v1793, %v1792
        %v1801 = vpack.c.bf16 %v1795, %v1794
        %v1802 = vpack.c.bf16 %v1797, %v1796
        %v1803 = vpack.c.bf16 %v1799, %v1798
        %v1804 = vld [vmem:[%s4 + $0x38] sm:$0xf]
        %v1805 = vld [vmem:[%s4 + $0x3c] sm:$0xf]
        %v1808 = vunpack.c.l.b16 %v1804
        %v1809 = vunpack.c.l.b16 %v1805
        %v1810 = vpack.c.b16 %v1809, %v1808
        %v1813 = vsel %vm470, %v1800, 0
        %v1816 = vsel %vm470, %v1801, 0
        %v1819 = vsel %vm470, %v1802, 0
        %v1822 = vsel %vm470, %v1803, 0
        %1824 = vmatpush.bf16.msra.mxu0 0
        %1825 = vmatpush.bf16.msra.mxu0 0
        %1826 = vmatpush.bf16.msra.mxu0 0
        %1827 = vmatpush.bf16.msra.mxu0 0
        %1828 = vmatpush.bf16.msra.mxu0 0
        %1829 = vmatpush.bf16.msra.mxu0 0
        %1830 = vmatpush.bf16.msra.mxu0 0
        %1831 = vmatpush.bf16.msra.mxu0 %v1810
        %1832 = vmatmul.bf16.gmra.mxu0 %v1813
        %v1833 = vpop.f32.mrf.mxu0
        %v1834 = vadd.f32 0.0, %v1833
        %v1835 = vpop.f32.mrf.mxu0
        %v1836 = vadd.f32 0.0, %v1835
        %1837 = vmatmul.bf16.gmra.mxu0 %v1816
        %v1838 = vpop.f32.mrf.mxu0
        %v1839 = vadd.f32 0.0, %v1838
        %v1840 = vpop.f32.mrf.mxu0
        %v1841 = vadd.f32 0.0, %v1840
        %1842 = vmatmul.bf16.gmra.mxu0 %v1819
        %v1843 = vpop.f32.mrf.mxu0
        %v1844 = vadd.f32 0.0, %v1843
        %v1845 = vpop.f32.mrf.mxu0
        %v1846 = vadd.f32 0.0, %v1845
        %1847 = vmatmul.bf16.gmra.mxu0 %v1822
        %v1848 = vpop.f32.mrf.mxu0
        %v1849 = vadd.f32 0.0, %v1848
        %v1850 = vpop.f32.mrf.mxu0
        %v1851 = vadd.f32 0.0, %v1850
        %1852 = vdwg.mxu0
        %v1853 = vadd.f32 %v1784, %v1834
        %v1854 = vadd.f32 %v1785, %v1836
        %v1855 = vadd.f32 %v1786, %v1839
        %v1856 = vadd.f32 %v1787, %v1841
        %v1857 = vadd.f32 %v1788, %v1844
        %v1858 = vadd.f32 %v1789, %v1846
        %v1859 = vadd.f32 %v1790, %v1849
        %v1860 = vadd.f32 %v1791, %v1851
        %v1861 = vmul.f32 %v1720, %v1184
        %v1862 = vmul.f32 %v1719, %v1188
        %v1863 = vmul.f32 %v1718, %v1192
        %v1864 = vmul.f32 %v1717, %v1196
        %v1865 = vmul.f32 %v1716, %v1200
        %v1866 = vmul.f32 %v1715, %v1204
        %v1867 = vmul.f32 %v1722, %v1208
        %v1868 = vmul.f32 %v1721, %v1212
        %v1869 = vpack.c.bf16 %v1862, %v1861
        %v1870 = vpack.c.bf16 %v1864, %v1863
        %v1871 = vpack.c.bf16 %v1866, %v1865
        %v1872 = vpack.c.bf16 %v1868, %v1867
        %v1873 = vld [vmem:[%s4 + $0x40] sm:$0xf]
        %v1874 = vld [vmem:[%s4 + $0x44] sm:$0xf]
        %v1877 = vunpack.c.l.b16 %v1873
        %v1878 = vunpack.c.l.b16 %v1874
        %v1879 = vpack.c.b16 %v1878, %v1877
        %v1882 = vsel %vm470, %v1869, 0
        %v1885 = vsel %vm470, %v1870, 0
        %v1888 = vsel %vm470, %v1871, 0
        %v1891 = vsel %vm470, %v1872, 0
        %1893 = vmatpush.bf16.msra.mxu0 0
        %1894 = vmatpush.bf16.msra.mxu0 0
        %1895 = vmatpush.bf16.msra.mxu0 0
        %1896 = vmatpush.bf16.msra.mxu0 0
        %1897 = vmatpush.bf16.msra.mxu0 0
        %1898 = vmatpush.bf16.msra.mxu0 0
        %1899 = vmatpush.bf16.msra.mxu0 0
        %1900 = vmatpush.bf16.msra.mxu0 %v1879
        %1901 = vmatmul.bf16.gmra.mxu0 %v1882
        %v1902 = vpop.f32.mrf.mxu0
        %v1903 = vadd.f32 0.0, %v1902
        %v1904 = vpop.f32.mrf.mxu0
        %v1905 = vadd.f32 0.0, %v1904
        %1906 = vmatmul.bf16.gmra.mxu0 %v1885
        %v1907 = vpop.f32.mrf.mxu0
        %v1908 = vadd.f32 0.0, %v1907
        %v1909 = vpop.f32.mrf.mxu0
        %v1910 = vadd.f32 0.0, %v1909
        %1911 = vmatmul.bf16.gmra.mxu0 %v1888
        %v1912 = vpop.f32.mrf.mxu0
        %v1913 = vadd.f32 0.0, %v1912
        %v1914 = vpop.f32.mrf.mxu0
        %v1915 = vadd.f32 0.0, %v1914
        %1916 = vmatmul.bf16.gmra.mxu0 %v1891
        %v1917 = vpop.f32.mrf.mxu0
        %v1918 = vadd.f32 0.0, %v1917
        %v1919 = vpop.f32.mrf.mxu0
        %v1920 = vadd.f32 0.0, %v1919
        %1921 = vdwg.mxu0
        %v1922 = vadd.f32 %v1853, %v1903
        %v1923 = vadd.f32 %v1854, %v1905
        %v1924 = vadd.f32 %v1855, %v1908
        %v1925 = vadd.f32 %v1856, %v1910
        %v1926 = vadd.f32 %v1857, %v1913
        %v1927 = vadd.f32 %v1858, %v1915
        %v1928 = vadd.f32 %v1859, %v1918
        %v1929 = vadd.f32 %v1860, %v1920
        %v1930 = vperm.slane %v1300, 0
        %v1931 = vadd.f32 %v1922, %v1930
        %v1932 = vadd.f32 %v1923, %v1930
        %v1933 = vadd.f32 %v1924, %v1930
        %v1934 = vadd.f32 %v1925, %v1930
        %v1935 = vadd.f32 %v1926, %v1930
        %v1936 = vadd.f32 %v1927, %v1930
        %v1937 = vadd.f32 %v1928, %v1930
        %v1938 = vadd.f32 %v1929, %v1930
        %v1939 = vmax.f32 %v1931, 0.0
        %v1940 = vmax.f32 %v1932, 0.0
        %v1941 = vmax.f32 %v1933, 0.0
        %v1942 = vmax.f32 %v1934, 0.0
        %v1943 = vmax.f32 %v1935, 0.0
        %v1944 = vmax.f32 %v1936, 0.0
        %v1945 = vmax.f32 %v1937, 0.0
        %v1946 = vmax.f32 %v1938, 0.0
        %v1947 = vpack.c.bf16 %v1939, %v1939
        %v1948 = vpack.c.bf16 %v1940, %v1940
        %v1949 = vpack.c.bf16 %v1941, %v1941
        %v1950 = vpack.c.bf16 %v1942, %v1942
        %v1951 = vpack.c.bf16 %v1943, %v1943
        %v1952 = vpack.c.bf16 %v1944, %v1944
        %v1953 = vpack.c.bf16 %v1945, %v1945
        %v1954 = vpack.c.bf16 %v1946, %v1946
        %v1963 = vunpack.c.l.b16 %v1947
        %v1964 = vunpack.c.l.b16 %v1948
        %v1965 = vunpack.c.l.b16 %v1949
        %v1966 = vunpack.c.l.b16 %v1950
        %v1967 = vunpack.c.l.b16 %v1951
        %v1968 = vunpack.c.l.b16 %v1952
        %v1969 = vunpack.c.l.b16 %v1953
        %v1970 = vunpack.c.l.b16 %v1954
        %v1971 = vpack.c.b16 %v1964, %v1963
        %v1972 = vpack.c.b16 %v1966, %v1965
        %v1973 = vpack.c.b16 %v1968, %v1967
        %v1974 = vpack.c.b16 %v1970, %v1969
        %v1983 = vunpack.c.l.b16 %v280
        %v1984 = vunpack.c.l.b16 %v281
        %v1985 = vunpack.c.l.b16 %v282
        %v1986 = vunpack.c.l.b16 %v283
        %v1987 = vunpack.c.l.b16 %v284
        %v1988 = vunpack.c.l.b16 %v285
        %v1989 = vunpack.c.l.b16 %v286
        %v1990 = vunpack.c.l.b16 %v287
        %v1991 = vpack.c.b16 %v1984, %v1983
        %v1992 = vpack.c.b16 %v1986, %v1985
        %v1993 = vpack.c.b16 %v1988, %v1987
        %v1994 = vpack.c.b16 %v1990, %v1989
        %1995 = vrot.lane.b32.xlu0 %v1991, 16
        %v1996 = vpop.permute.xlu0 %1995
        %1997 = vrot.lane.b32.xlu0 %v1992, 16
        %v1998 = vpop.permute.xlu0 %1997
        %1999 = vrot.lane.b32.xlu0 %v1993, 16
        %v2000 = vpop.permute.xlu0 %1999
        %2001 = vrot.lane.b32.xlu0 %v1994, 16
        %v2002 = vpop.permute.xlu0 %2001
        %v2005 = vsel %vm470, %v1971, %v1996
        %v2008 = vsel %vm470, %v1972, %v1998
        %v2011 = vsel %vm470, %v1973, %v2000
        %v2014 = vsel %vm470, %v1974, %v2002
        %v2015 = vld [vmem:[%s5] sm:$0xf]
        %v2016 = vld [vmem:[%s5 + $0x4] sm:$0xf]
        %v2017 = vld [vmem:[%s5 + $0x8] sm:$0xf]
        %v2018 = vld [vmem:[%s5 + $0xc] sm:$0xf]
        %v2019 = vld [vmem:[%s5 + $0x10] sm:$0xf]
        %v2020 = vld [vmem:[%s5 + $0x14] sm:$0xf]
        %v2021 = vld [vmem:[%s6 + $0x3] sm:$0x1]
        %v2022 = vperm.slane %v2021, 0
        %v2029 = vunpack.c.l.b16 %v2015
        %v2030 = vunpack.c.l.b16 %v2016
        %v2031 = vunpack.c.l.b16 %v2017
        %v2032 = vunpack.c.l.b16 %v2018
        %v2033 = vunpack.c.l.b16 %v2019
        %v2034 = vunpack.c.l.b16 %v2020
        %v2035 = vpack.c.b16 %v2030, %v2029
        %v2036 = vpack.c.b16 %v2032, %v2031
        %v2037 = vpack.c.b16 %v2034, %v2033
        %vm2041 = vcmask 392192
        %v2042 = vsel %vm2041, %v2005, 0
        %v2044 = vsel %vm2041, %v2008, 0
        %v2046 = vsel %vm2041, %v2011, 0
        %v2048 = vsel %vm2041, %v2014, 0
        %2050 = vmatpush.bf16.msra.mxu0 0
        %2051 = vmatpush.bf16.msra.mxu0 0
        %2052 = vmatpush.bf16.msra.mxu0 0
        %2053 = vmatpush.bf16.msra.mxu0 0
        %2054 = vmatpush.bf16.msra.mxu0 0
        %2055 = vmatpush.bf16.msra.mxu0 %v2037
        %2056 = vmatpush.bf16.msra.mxu0 %v2036
        %2057 = vmatpush.bf16.msra.mxu0 %v2035
        %2058 = vmatmul.bf16.gmra.mxu0 %v2042
        %v2059 = vpop.f32.mrf.mxu0
        %v2060 = vadd.f32 %v2022, %v2059
        %v2061 = vpop.f32.mrf.mxu0
        %v2062 = vadd.f32 %v2022, %v2061
        %2063 = vmatmul.bf16.gmra.mxu0 %v2044
        %v2064 = vpop.f32.mrf.mxu0
        %v2065 = vadd.f32 %v2022, %v2064
        %v2066 = vpop.f32.mrf.mxu0
        %v2067 = vadd.f32 %v2022, %v2066
        %2068 = vmatmul.bf16.gmra.mxu0 %v2046
        %v2069 = vpop.f32.mrf.mxu0
        %v2070 = vadd.f32 %v2022, %v2069
        %v2071 = vpop.f32.mrf.mxu0
        %v2072 = vadd.f32 %v2022, %v2071
        %2073 = vmatmul.bf16.gmra.mxu0 %v2048
        %v2074 = vpop.f32.mrf.mxu0
        %v2075 = vadd.f32 %v2022, %v2074
        %v2076 = vpop.f32.mrf.mxu0
        %v2077 = vadd.f32 %v2022, %v2076
        %2078 = vdwg.mxu0
        %2079 = vst.msk [vmem:[%s272] sm:$0xff] %vm470, %v2060
        %2081 = vrot.lane.b32.xlu0 %v2062, 16
        %v2082 = vpop.permute.xlu0 %2081
        %vm2084 = vcmask 261248
        %2085 = vst.msk [vmem:[%s272] sm:$0xff] %vm2084, %v2082
        %2087 = vrot.lane.b32.xlu0 %v2065, 32
        %v2088 = vpop.permute.xlu0 %2087
        %vm2090 = vcmask 392448
        %2091 = vst.msk [vmem:[%s272] sm:$0xff] %vm2090, %v2088
        %2093 = vrot.lane.b32.xlu0 %v2067, 48
        %v2094 = vpop.permute.xlu0 %2093
        %vm2096 = vcmask 523648
        %2097 = vst.msk [vmem:[%s272] sm:$0xff] %vm2096, %v2094
        %2099 = vrot.lane.b32.xlu0 %v2070, 64
        %v2100 = vpop.permute.xlu0 %2099
        %vm2102 = vcmask 654848
        %2103 = vst.msk [vmem:[%s272] sm:$0xff] %vm2102, %v2100
        %2105 = vrot.lane.b32.xlu0 %v2072, 80
        %v2106 = vpop.permute.xlu0 %2105
        %vm2108 = vcmask 786048
        %2109 = vst.msk [vmem:[%s272] sm:$0xff] %vm2108, %v2106
        %2111 = vrot.lane.b32.xlu0 %v2075, 96
        %v2112 = vpop.permute.xlu0 %2111
        %vm2114 = vcmask 917248
        %2115 = vst.msk [vmem:[%s272] sm:$0xff] %vm2114, %v2112
        %2117 = vrot.lane.b32.xlu0 %v2077, 112
        %v2118 = vpop.permute.xlu0 %2117
        %vm2120 = vcmask 1048448
        %2121 = vst.msk [vmem:[%s272] sm:$0xff] %vm2120, %v2118
        %s2122 = sand.u32 %s181, 1
        %s2123 = scalar_lea.sflag [#allocation3], %s2122
        %s2124 = sand.u32 %s181, 1
        %s2125 = smul.addr %s2124, 8
        %s2126 = scalar_lea.vmem [#allocation2], %s2125
        // Predicated region
        $region49: #{tpu_custom_call.1} parent=47 // pred_check
          %p2127 = pneg %p191
        $region50: #{tpu_custom_call.1} parent=47 // pred_check_branch
          %2129 = sbr.rel (%p2127) target = $region52
        $region51: #{tpu_custom_call.1} parent=47 // pred_region
          %2131 = vsyncadd %s2123, 0
          %s2132 = smul.addr %s21, 8
          %s2133 = scalar_lea.hbm %s7, %s2132
          %s2135 = sshll.u32 %s2126, 4
          %s2136 = int_to_ptr.vmem [resolvable:$true] %s2135
          %s2137 = sshll.u32 %s2133, 4
          %s2138 = int_to_ptr.hbm [resolvable:$true] %s2137
          %2140 = dma.vmem_to_hbm [thread:$0]  %s2136, 128, %s2138, %s2123
        $region52: #{tpu_custom_call.1} parent=47 // pred_fallthru
          _
      $region48: #{tpu_custom_call.1} parent=5 // pred_fallthru
        _
      %p2141 = scmp.le.s32.totalorder 2, %s16
      // Predicated region
      $region53: #{tpu_custom_call.1} parent=5 // pred_check
        %p2142 = pneg %p2141
      $region54: #{tpu_custom_call.1} parent=5 // pred_check_branch
        %2144 = sbr.rel (%p2142) target = $region56
      $region55: #{tpu_custom_call.1} parent=5 // pred_region
        %s2145 = ssub.s32 %s16, 2
        // Predicated region
        $region57: #{tpu_custom_call.1} parent=55 // pred_check
          %p2146 = pneg %p197
        $region58: #{tpu_custom_call.1} parent=55 // pred_check_branch
          %2148 = sbr.rel (%p2146) target = $region60
        $region59: #{tpu_custom_call.1} parent=55 // pred_region
          %s2149 = sand.u32 %s182, 1
          %s2150 = scalar_lea.sflag [#allocation3], %s2149
          %s2151 = sand.u32 %s182, 1
          %s2152 = smul.addr %s2151, 8
          %s2153 = scalar_lea.vmem [#allocation2], %s2152
          %2155 = dma.done %s2150, 128
        $region60: #{tpu_custom_call.1} parent=55 // pred_fallthru
          _
      $region56: #{tpu_custom_call.1} parent=5 // pred_fallthru
        _
    $region6: #{tpu_custom_call.1} parent=1 // loop_footer
      %s20 = sadd.s32 1, %s16
    $region7: #{tpu_custom_call.1} parent=1 // loop_footer_branch
      %15 = sbr.rel target = $region3
    $region8: #{tpu_custom_call.1} parent=1 // loop_exit
      _
    %2156 = vsyncpa [#allocation3], 1
    %s2157 = scalar_lea.sflag [#allocation3], 1
    %2158 = vsyncpa %s2157, 1

</llo_original>
